<compile_context>
chip_gen: v7x
topology: tpu7x:2x2x1
jax: 0.10.0
libtpu: 0.0.40
codegen_flags: <defaults>
</compile_context>

<pallas_src>
import functools

import jax
import jax.numpy as jnp
from jax.experimental import pallas as pl
from jax.experimental.pallas import tpu as pltpu


def seq_cls_kernel(x_ref, action_ref,
                   wih1_ref, b1_ref,
                   wbig_ref, b2_ref,
                   w1_ref, bm1_ref, w2m_ref, bm2_ref, w3_ref, bm3_ref,
                   out_ref):
    B = action_ref.shape[0]
    TB, D = x_ref.shape
    T = TB // B
    H4 = b1_ref.shape[1]
    H = H4 // 4

    wbig = wbig_ref[...]          # (2H, 8H) block weight [[wih2, whh1], [whh2, 0]]

    # Hoisted layer-0 input projection for all timesteps, bias folded in.
    # (g-gate columns are pre-scaled by 2 for the sigmoid/tanh identity.)
    xw1 = (jnp.dot(x_ref[...], wih1_ref[...], preferred_element_type=jnp.float32)
           + b1_ref[...])         # (T*B, 4H)

    # Hoist layer-1 bias broadcast out of the recurrence.
    b2b = jnp.broadcast_to(b2_ref[...], (B, H4))

    def cell(gates, c):
        """LSTM cell from pre-activation gates (B,4H) = [i|f|2*g|o]; 2 EUP pushes."""
        sig = jax.nn.sigmoid(gates)                     # one EUP push over (B, 4H)
        i = sig[:, 0 * H:1 * H]
        f = sig[:, 1 * H:2 * H]
        g = 2.0 * sig[:, 2 * H:3 * H] - 1.0             # tanh(g) via sigmoid identity (VPU)
        o = sig[:, 3 * H:4 * H]
        c_new = f * c + i * g
        h_new = o * (2.0 * jax.nn.sigmoid(2.0 * c_new) - 1.0)   # tanh(c_new), 2nd EUP push
        return h_new, c_new

    # Recurrent part of layer-0 gates for step 0 is zero (h1(-1) = 0).
    rec1 = jnp.zeros((B, H4), jnp.float32)
    h2 = jnp.zeros((B, H), jnp.float32)
    c1 = jnp.zeros((B, H), jnp.float32)
    c2 = jnp.zeros((B, H), jnp.float32)

    # T is static and small -> fully unrolled chain, static slices into xw1.
    for t in range(T):
        # Layer 0: input projection (precomputed) + recurrent part (from previous fused dot).
        g1 = xw1[t * B:(t + 1) * B, :] + rec1
        h1, c1 = cell(g1, c1)

        # Single fused MXU issue: layer-1 gates AND next step's layer-0 recurrent part.
        big = jnp.dot(jnp.concatenate([h1, h2], axis=-1), wbig,
                      preferred_element_type=jnp.float32)        # (B, 8H)
        g2 = big[:, :H4] + b2b
        rec1 = big[:, H4:]
        h2, c2 = cell(g2, c2)

    # out[:, -1, :] of the top LSTM layer is h2; concat with action and run the MLP head.
    mlp_in = jnp.concatenate([h2, action_ref[...]], axis=-1)

    z1 = jnp.maximum(
        jnp.dot(mlp_in, w1_ref[...], preferred_element_type=jnp.float32)
        + bm1_ref[...], 0.0)
    z2 = jnp.maximum(
        jnp.dot(z1, w2m_ref[...], preferred_element_type=jnp.float32)
        + bm2_ref[...], 0.0)
    # Final layer zero-padded to 128 output lanes -> lane-dense matmul + store.
    z3 = (jnp.dot(z2, w3_ref[...], preferred_element_type=jnp.float32)
          + bm3_ref[...])                                        # (B, 128)
    out_ref[...] = jax.nn.sigmoid(z3)


def init_params(key, observation_dim, hidden_dim):
    """Deterministic synthetic parameters (shapes as in torch nn.LSTM / nn.Linear)."""
    D, H = observation_dim, hidden_dim
    k = 1.0 / jnp.sqrt(jnp.float32(H))
    ks = jax.random.split(key, 20)

    def u(kk, shape):
        return jax.random.uniform(kk, shape, jnp.float32, -k, k)

    params = {
        # LSTM layer 0 (input size D) and layer 1 (input size H); transposed for matmul.
        "wih1_t": u(ks[0], (D, 4 * H)),
        "whh1_t": u(ks[1], (H, 4 * H)),
        "b1": u(ks[2], (1, 4 * H)) + u(ks[3], (1, 4 * H)),   # b_ih + b_hh combined
        "wih2_t": u(ks[4], (H, 4 * H)),
        "whh2_t": u(ks[5], (H, 4 * H)),
        "b2": u(ks[6], (1, 4 * H)) + u(ks[7], (1, 4 * H)),
        # MLP: Linear(H+D, H) -> ReLU -> Linear(H, H//2) -> ReLU -> Linear(H//2, 1)
        "w1_t": u(ks[8], (H + D, H)),
        "bm1": u(ks[9], (1, H)),
        "w2_t": u(ks[10], (H, H // 2)),
        "bm2": u(ks[11], (1, H // 2)),
        "w3_t": u(ks[12], (H // 2, 1)),
        "bm3": u(ks[13], (1, 1)),
    }
    return params


def _scale_g_gate(a):
    """Scale the g-gate columns (block [2H:3H] of the last dim, size 4H) by 2."""
    H = a.shape[-1] // 4
    scale = jnp.concatenate([jnp.ones((H,), jnp.float32),
                             jnp.ones((H,), jnp.float32),
                             jnp.full((H,), 2.0, jnp.float32),
                             jnp.ones((H,), jnp.float32)])
    return a * scale


@functools.partial(jax.jit, static_argnames=())
def sequence_classification_forward(x, action, params):
    B, T, D = x.shape
    H = params["whh1_t"].shape[0]

    # Time-major + flattened layout so the hoisted projection needs no in-kernel relayout.
    x_flat = jnp.transpose(x, (1, 0, 2)).reshape(T * B, D)   # (T*B, D), row t*B+b = x[b,t]

    # Pre-scale g-gate columns by 2 (enables the tanh(x)=2*sigmoid(2x)-1 identity in-kernel).
    wih1_s = _scale_g_gate(params["wih1_t"])
    whh1_s = _scale_g_gate(params["whh1_t"])
    b1_s = _scale_g_gate(params["b1"])
    wih2_s = _scale_g_gate(params["wih2_t"])
    whh2_s = _scale_g_gate(params["whh2_t"])
    b2_s = _scale_g_gate(params["b2"])

    # Block weight: [h1(t) | h2(t-1)] @ W_big gives [g2(t) | h1(t)@whh1] in one matmul.
    w_big = jnp.concatenate(
        [jnp.concatenate([wih2_s, whh1_s], axis=1),                       # (H, 8H)
         jnp.concatenate([whh2_s, jnp.zeros((H, 4 * H), jnp.float32)], axis=1)],
        axis=0)                                                           # (2H, 8H)

    # Zero-pad the final Linear to 128 output lanes (lane-dense matmul + store).
    w3_pad = jnp.zeros((H // 2, 128), jnp.float32).at[:, :1].set(params["w3_t"])
    bm3_pad = jnp.zeros((1, 128), jnp.float32).at[:, :1].set(params["bm3"])

    inputs = [x_flat, action,
              wih1_s, b1_s,
              w_big, b2_s,
              params["w1_t"], params["bm1"],
              params["w2_t"], params["bm2"],
              w3_pad, bm3_pad]

    vmem = pl.BlockSpec(memory_space=pltpu.MemorySpace.VMEM)
    out_wide = pl.pallas_call(
        seq_cls_kernel,
        out_shape=jax.ShapeDtypeStruct((B, 128), jnp.float32),
        in_specs=[vmem] * len(inputs),
        out_specs=vmem,
    )(*inputs)
    return out_wide[:, 0:1]


def reference_forward(x, action, params):
    """Pure-JAX reference with torch.nn.LSTM semantics."""
    B, T, D = x.shape
    H = params["whh1_t"].shape[0]

    def cell(xt, h, c, wih, whh, b):
        g = xt @ wih + h @ whh + b
        i = jax.nn.sigmoid(g[:, :H])
        f = jax.nn.sigmoid(g[:, H:2 * H])
        gg = jnp.tanh(g[:, 2 * H:3 * H])
        o = jax.nn.sigmoid(g[:, 3 * H:])
        c = f * c + i * gg
        return o * jnp.tanh(c), c

    h1 = c1 = h2 = c2 = jnp.zeros((B, H), jnp.float32)
    for t in range(T):
        h1, c1 = cell(x[:, t, :], h1, c1, params["wih1_t"], params["whh1_t"], params["b1"])
        h2, c2 = cell(h1, h2, c2, params["wih2_t"], params["whh2_t"], params["b2"])
    z = jnp.concatenate([h2, action], axis=-1)
    z = jnp.maximum(z @ params["w1_t"] + params["bm1"], 0.0)
    z = jnp.maximum(z @ params["w2_t"] + params["bm2"], 0.0)
    z = z @ params["w3_t"] + params["bm3"]
    return jax.nn.sigmoid(z)


if __name__ == "__main__":
    observation_dim = 32
    hidden_dim = 32
    batch = 8
    seq = 8

    key = jax.random.PRNGKey(0)
    kp, kx, ka = jax.random.split(key, 3)

    params = init_params(kp, observation_dim, hidden_dim)
    x = jax.random.normal(kx, (batch, seq, observation_dim), jnp.float32)
    action = jax.random.normal(ka, (batch, observation_dim), jnp.float32)

    out = sequence_classification_forward(x, action, params)
    out = jax.block_until_ready(out)

    ref = reference_forward(x, action, params)
    assert out.shape == (batch, 1)
    # All-f32 kernel; tolerance covers matmul-fusion reassociation and the
    # tanh(x) = 2*sigmoid(2x) - 1 rewrite (~1e-7-level perturbation).
    assert jnp.allclose(out, ref, atol=5e-5, rtol=1e-4), "mismatch vs pure-JAX reference"

    print("KERNEL_OK")
</pallas_src>

<mosaic_0001>
module attributes {stable_mosaic.version = 11 : i64} {
  func.func @seq_cls_kernel(%arg0: memref<64x32xf32, #tpu.memory_space<vmem>>, %arg1: memref<8x32xf32, #tpu.memory_space<vmem>>, %arg2: memref<32x128xf32, #tpu.memory_space<vmem>>, %arg3: memref<1x128xf32, #tpu.memory_space<vmem>>, %arg4: memref<64x256xf32, #tpu.memory_space<vmem>>, %arg5: memref<1x128xf32, #tpu.memory_space<vmem>>, %arg6: memref<64x32xf32, #tpu.memory_space<vmem>>, %arg7: memref<1x32xf32, #tpu.memory_space<vmem>>, %arg8: memref<32x16xf32, #tpu.memory_space<vmem>>, %arg9: memref<1x16xf32, #tpu.memory_space<vmem>>, %arg10: memref<16x128xf32, #tpu.memory_space<vmem>>, %arg11: memref<1x128xf32, #tpu.memory_space<vmem>>, %arg12: memref<8x128xf32, #tpu.memory_space<vmem>>) attributes {dimension_semantics = [], scalar_prefetch = 0 : i64, scratch_operands = 0 : i64, tpu.core_type = #tpu.core_type<tc>} {
    %c0 = arith.constant 0 : index
    %c0_0 = arith.constant 0 : index
    %0 = vector.load %arg4[%c0, %c0_0] : memref<64x256xf32, #tpu.memory_space<vmem>>, vector<64x256xf32>
    %c0_1 = arith.constant 0 : index
    %c0_2 = arith.constant 0 : index
    %1 = vector.load %arg0[%c0_1, %c0_2] : memref<64x32xf32, #tpu.memory_space<vmem>>, vector<64x32xf32>
    %c0_3 = arith.constant 0 : index
    %c0_4 = arith.constant 0 : index
    %2 = vector.load %arg2[%c0_3, %c0_4] : memref<32x128xf32, #tpu.memory_space<vmem>>, vector<32x128xf32>
    %cst = arith.constant dense<0.000000e+00> : vector<64x128xf32>
    %3 = tpu.matmul %1, %2, %cst {dimension_numbers = #tpu.dot_dimension_numbers<[1], [0], [0], [1], [0, 0, 1, 1], [], []>} : vector<64x32xf32>, vector<32x128xf32>, vector<64x128xf32> -> vector<64x128xf32>
    %c0_5 = arith.constant 0 : index
    %c0_6 = arith.constant 0 : index
    %4 = vector.load %arg3[%c0_5, %c0_6] : memref<1x128xf32, #tpu.memory_space<vmem>>, vector<1x128xf32>
    %5 = vector.broadcast %4 : vector<1x128xf32> to vector<64x128xf32>
    %6 = arith.addf %3, %5 : vector<64x128xf32>
    %c0_7 = arith.constant 0 : index
    %c0_8 = arith.constant 0 : index
    %7 = vector.load %arg5[%c0_7, %c0_8] : memref<1x128xf32, #tpu.memory_space<vmem>>, vector<1x128xf32>
    %8 = vector.shape_cast %7 : vector<1x128xf32> to vector<1x128xf32>
    %9 = vector.broadcast %8 : vector<1x128xf32> to vector<8x128xf32>
    %cst_9 = arith.constant 0.000000e+00 : f32
    %10 = vector.broadcast %cst_9 : f32 to vector<8x128xf32>
    %cst_10 = arith.constant 0.000000e+00 : f32
    %11 = vector.broadcast %cst_10 : f32 to vector<8x32xf32>
    %cst_11 = arith.constant 0.000000e+00 : f32
    %12 = vector.broadcast %cst_11 : f32 to vector<8x32xf32>
    %cst_12 = arith.constant 0.000000e+00 : f32
    %13 = vector.broadcast %cst_12 : f32 to vector<8x32xf32>
    %14 = vector.extract_strided_slice %6 {offsets = [0, 0], sizes = [8, 128], strides = [1, 1]} : vector<64x128xf32> to vector<8x128xf32>
    %15 = arith.addf %14, %10 : vector<8x128xf32>
    %16 = arith.negf %15 : vector<8x128xf32>
    %17 = math.exp %16 : vector<8x128xf32>
    %cst_13 = arith.constant 1.000000e+00 : f32
    %18 = vector.broadcast %cst_13 : f32 to vector<8x128xf32>
    %19 = arith.addf %18, %17 : vector<8x128xf32>
    %20 = arith.divf %18, %19 : vector<8x128xf32>
    %21 = vector.extract_strided_slice %20 {offsets = [0, 0], sizes = [8, 32], strides = [1, 1]} : vector<8x128xf32> to vector<8x32xf32>
    %22 = vector.extract_strided_slice %20 {offsets = [0, 32], sizes = [8, 32], strides = [1, 1]} : vector<8x128xf32> to vector<8x32xf32>
    %23 = vector.extract_strided_slice %20 {offsets = [0, 64], sizes = [8, 32], strides = [1, 1]} : vector<8x128xf32> to vector<8x32xf32>
    %cst_14 = arith.constant 2.000000e+00 : f32
    %24 = vector.broadcast %cst_14 : f32 to vector<8x32xf32>
    %25 = arith.mulf %24, %23 : vector<8x32xf32>
    %cst_15 = arith.constant 1.000000e+00 : f32
    %26 = vector.broadcast %cst_15 : f32 to vector<8x32xf32>
    %27 = arith.subf %25, %26 : vector<8x32xf32>
    %28 = vector.extract_strided_slice %20 {offsets = [0, 96], sizes = [8, 32], strides = [1, 1]} : vector<8x128xf32> to vector<8x32xf32>
    %29 = arith.mulf %22, %12 : vector<8x32xf32>
    %30 = arith.mulf %21, %27 : vector<8x32xf32>
    %31 = arith.addf %29, %30 : vector<8x32xf32>
    %cst_16 = arith.constant 2.000000e+00 : f32
    %32 = vector.broadcast %cst_16 : f32 to vector<8x32xf32>
    %33 = arith.mulf %32, %31 : vector<8x32xf32>
    %34 = arith.negf %33 : vector<8x32xf32>
    %35 = math.exp %34 : vector<8x32xf32>
    %cst_17 = arith.constant 1.000000e+00 : f32
    %36 = vector.broadcast %cst_17 : f32 to vector<8x32xf32>
    %37 = arith.addf %36, %35 : vector<8x32xf32>
    %38 = arith.divf %36, %37 : vector<8x32xf32>
    %cst_18 = arith.constant 2.000000e+00 : f32
    %39 = vector.broadcast %cst_18 : f32 to vector<8x32xf32>
    %40 = arith.mulf %39, %38 : vector<8x32xf32>
    %cst_19 = arith.constant 1.000000e+00 : f32
    %41 = vector.broadcast %cst_19 : f32 to vector<8x32xf32>
    %42 = arith.subf %40, %41 : vector<8x32xf32>
    %43 = arith.mulf %28, %42 : vector<8x32xf32>
    %44 = tpu.concatenate %43, %11 in 1 : vector<8x32xf32>, vector<8x32xf32> -> vector<8x64xf32>
    %cst_20 = arith.constant dense<0.000000e+00> : vector<8x256xf32>
    %45 = tpu.matmul %44, %0, %cst_20 {dimension_numbers = #tpu.dot_dimension_numbers<[1], [0], [0], [1], [0, 0, 1, 1], [], []>} : vector<8x64xf32>, vector<64x256xf32>, vector<8x256xf32> -> vector<8x256xf32>
    %46 = vector.extract_strided_slice %45 {offsets = [0, 0], sizes = [8, 128], strides = [1, 1]} : vector<8x256xf32> to vector<8x128xf32>
    %47 = arith.addf %46, %9 : vector<8x128xf32>
    %48 = vector.extract_strided_slice %45 {offsets = [0, 128], sizes = [8, 128], strides = [1, 1]} : vector<8x256xf32> to vector<8x128xf32>
    %49 = arith.negf %47 : vector<8x128xf32>
    %50 = math.exp %49 : vector<8x128xf32>
    %cst_21 = arith.constant 1.000000e+00 : f32
    %51 = vector.broadcast %cst_21 : f32 to vector<8x128xf32>
    %52 = arith.addf %51, %50 : vector<8x128xf32>
    %53 = arith.divf %51, %52 : vector<8x128xf32>
    %54 = vector.extract_strided_slice %53 {offsets = [0, 0], sizes = [8, 32], strides = [1, 1]} : vector<8x128xf32> to vector<8x32xf32>
    %55 = vector.extract_strided_slice %53 {offsets = [0, 32], sizes = [8, 32], strides = [1, 1]} : vector<8x128xf32> to vector<8x32xf32>
    %56 = vector.extract_strided_slice %53 {offsets = [0, 64], sizes = [8, 32], strides = [1, 1]} : vector<8x128xf32> to vector<8x32xf32>
    %cst_22 = arith.constant 2.000000e+00 : f32
    %57 = vector.broadcast %cst_22 : f32 to vector<8x32xf32>
    %58 = arith.mulf %57, %56 : vector<8x32xf32>
    %cst_23 = arith.constant 1.000000e+00 : f32
    %59 = vector.broadcast %cst_23 : f32 to vector<8x32xf32>
    %60 = arith.subf %58, %59 : vector<8x32xf32>
    %61 = vector.extract_strided_slice %53 {offsets = [0, 96], sizes = [8, 32], strides = [1, 1]} : vector<8x128xf32> to vector<8x32xf32>
    %62 = arith.mulf %55, %13 : vector<8x32xf32>
    %63 = arith.mulf %54, %60 : vector<8x32xf32>
    %64 = arith.addf %62, %63 : vector<8x32xf32>
    %cst_24 = arith.constant 2.000000e+00 : f32
    %65 = vector.broadcast %cst_24 : f32 to vector<8x32xf32>
    %66 = arith.mulf %65, %64 : vector<8x32xf32>
    %67 = arith.negf %66 : vector<8x32xf32>
    %68 = math.exp %67 : vector<8x32xf32>
    %cst_25 = arith.constant 1.000000e+00 : f32
    %69 = vector.broadcast %cst_25 : f32 to vector<8x32xf32>
    %70 = arith.addf %69, %68 : vector<8x32xf32>
    %71 = arith.divf %69, %70 : vector<8x32xf32>
    %cst_26 = arith.constant 2.000000e+00 : f32
    %72 = vector.broadcast %cst_26 : f32 to vector<8x32xf32>
    %73 = arith.mulf %72, %71 : vector<8x32xf32>
    %cst_27 = arith.constant 1.000000e+00 : f32
    %74 = vector.broadcast %cst_27 : f32 to vector<8x32xf32>
    %75 = arith.subf %73, %74 : vector<8x32xf32>
    %76 = arith.mulf %61, %75 : vector<8x32xf32>
    %77 = vector.extract_strided_slice %6 {offsets = [8, 0], sizes = [8, 128], strides = [1, 1]} : vector<64x128xf32> to vector<8x128xf32>
    %78 = arith.addf %77, %48 : vector<8x128xf32>
    %79 = arith.negf %78 : vector<8x128xf32>
    %80 = math.exp %79 : vector<8x128xf32>
    %cst_28 = arith.constant 1.000000e+00 : f32
    %81 = vector.broadcast %cst_28 : f32 to vector<8x128xf32>
    %82 = arith.addf %81, %80 : vector<8x128xf32>
    %83 = arith.divf %81, %82 : vector<8x128xf32>
    %84 = vector.extract_strided_slice %83 {offsets = [0, 0], sizes = [8, 32], strides = [1, 1]} : vector<8x128xf32> to vector<8x32xf32>
    %85 = vector.extract_strided_slice %83 {offsets = [0, 32], sizes = [8, 32], strides = [1, 1]} : vector<8x128xf32> to vector<8x32xf32>
    %86 = vector.extract_strided_slice %83 {offsets = [0, 64], sizes = [8, 32], strides = [1, 1]} : vector<8x128xf32> to vector<8x32xf32>
    %cst_29 = arith.constant 2.000000e+00 : f32
    %87 = vector.broadcast %cst_29 : f32 to vector<8x32xf32>
    %88 = arith.mulf %87, %86 : vector<8x32xf32>
    %cst_30 = arith.constant 1.000000e+00 : f32
    %89 = vector.broadcast %cst_30 : f32 to vector<8x32xf32>
    %90 = arith.subf %88, %89 : vector<8x32xf32>
    %91 = vector.extract_strided_slice %83 {offsets = [0, 96], sizes = [8, 32], strides = [1, 1]} : vector<8x128xf32> to vector<8x32xf32>
    %92 = arith.mulf %85, %31 : vector<8x32xf32>
    %93 = arith.mulf %84, %90 : vector<8x32xf32>
    %94 = arith.addf %92, %93 : vector<8x32xf32>
    %cst_31 = arith.constant 2.000000e+00 : f32
    %95 = vector.broadcast %cst_31 : f32 to vector<8x32xf32>
    %96 = arith.mulf %95, %94 : vector<8x32xf32>
    %97 = arith.negf %96 : vector<8x32xf32>
    %98 = math.exp %97 : vector<8x32xf32>
    %cst_32 = arith.constant 1.000000e+00 : f32
    %99 = vector.broadcast %cst_32 : f32 to vector<8x32xf32>
    %100 = arith.addf %99, %98 : vector<8x32xf32>
    %101 = arith.divf %99, %100 : vector<8x32xf32>
    %cst_33 = arith.constant 2.000000e+00 : f32
    %102 = vector.broadcast %cst_33 : f32 to vector<8x32xf32>
    %103 = arith.mulf %102, %101 : vector<8x32xf32>
    %cst_34 = arith.constant 1.000000e+00 : f32
    %104 = vector.broadcast %cst_34 : f32 to vector<8x32xf32>
    %105 = arith.subf %103, %104 : vector<8x32xf32>
    %106 = arith.mulf %91, %105 : vector<8x32xf32>
    %107 = tpu.concatenate %106, %76 in 1 : vector<8x32xf32>, vector<8x32xf32> -> vector<8x64xf32>
    %cst_35 = arith.constant dense<0.000000e+00> : vector<8x256xf32>
    %108 = tpu.matmul %107, %0, %cst_35 {dimension_numbers = #tpu.dot_dimension_numbers<[1], [0], [0], [1], [0, 0, 1, 1], [], []>} : vector<8x64xf32>, vector<64x256xf32>, vector<8x256xf32> -> vector<8x256xf32>
    %109 = vector.extract_strided_slice %108 {offsets = [0, 0], sizes = [8, 128], strides = [1, 1]} : vector<8x256xf32> to vector<8x128xf32>
    %110 = arith.addf %109, %9 : vector<8x128xf32>
    %111 = vector.extract_strided_slice %108 {offsets = [0, 128], sizes = [8, 128], strides = [1, 1]} : vector<8x256xf32> to vector<8x128xf32>
    %112 = arith.negf %110 : vector<8x128xf32>
    %113 = math.exp %112 : vector<8x128xf32>
    %cst_36 = arith.constant 1.000000e+00 : f32
    %114 = vector.broadcast %cst_36 : f32 to vector<8x128xf32>
    %115 = arith.addf %114, %113 : vector<8x128xf32>
    %116 = arith.divf %114, %115 : vector<8x128xf32>
    %117 = vector.extract_strided_slice %116 {offsets = [0, 0], sizes = [8, 32], strides = [1, 1]} : vector<8x128xf32> to vector<8x32xf32>
    %118 = vector.extract_strided_slice %116 {offsets = [0, 32], sizes = [8, 32], strides = [1, 1]} : vector<8x128xf32> to vector<8x32xf32>
    %119 = vector.extract_strided_slice %116 {offsets = [0, 64], sizes = [8, 32], strides = [1, 1]} : vector<8x128xf32> to vector<8x32xf32>
    %cst_37 = arith.constant 2.000000e+00 : f32
    %120 = vector.broadcast %cst_37 : f32 to vector<8x32xf32>
    %121 = arith.mulf %120, %119 : vector<8x32xf32>
    %cst_38 = arith.constant 1.000000e+00 : f32
    %122 = vector.broadcast %cst_38 : f32 to vector<8x32xf32>
    %123 = arith.subf %121, %122 : vector<8x32xf32>
    %124 = vector.extract_strided_slice %116 {offsets = [0, 96], sizes = [8, 32], strides = [1, 1]} : vector<8x128xf32> to vector<8x32xf32>
    %125 = arith.mulf %118, %64 : vector<8x32xf32>
    %126 = arith.mulf %117, %123 : vector<8x32xf32>
    %127 = arith.addf %125, %126 : vector<8x32xf32>
    %cst_39 = arith.constant 2.000000e+00 : f32
    %128 = vector.broadcast %cst_39 : f32 to vector<8x32xf32>
    %129 = arith.mulf %128, %127 : vector<8x32xf32>
    %130 = arith.negf %129 : vector<8x32xf32>
    %131 = math.exp %130 : vector<8x32xf32>
    %cst_40 = arith.constant 1.000000e+00 : f32
    %132 = vector.broadcast %cst_40 : f32 to vector<8x32xf32>
    %133 = arith.addf %132, %131 : vector<8x32xf32>
    %134 = arith.divf %132, %133 : vector<8x32xf32>
    %cst_41 = arith.constant 2.000000e+00 : f32
    %135 = vector.broadcast %cst_41 : f32 to vector<8x32xf32>
    %136 = arith.mulf %135, %134 : vector<8x32xf32>
    %cst_42 = arith.constant 1.000000e+00 : f32
    %137 = vector.broadcast %cst_42 : f32 to vector<8x32xf32>
    %138 = arith.subf %136, %137 : vector<8x32xf32>
    %139 = arith.mulf %124, %138 : vector<8x32xf32>
    %140 = vector.extract_strided_slice %6 {offsets = [16, 0], sizes = [8, 128], strides = [1, 1]} : vector<64x128xf32> to vector<8x128xf32>
    %141 = arith.addf %140, %111 : vector<8x128xf32>
    %142 = arith.negf %141 : vector<8x128xf32>
    %143 = math.exp %142 : vector<8x128xf32>
    %cst_43 = arith.constant 1.000000e+00 : f32
    %144 = vector.broadcast %cst_43 : f32 to vector<8x128xf32>
    %145 = arith.addf %144, %143 : vector<8x128xf32>
    %146 = arith.divf %144, %145 : vector<8x128xf32>
    %147 = vector.extract_strided_slice %146 {offsets = [0, 0], sizes = [8, 32], strides = [1, 1]} : vector<8x128xf32> to vector<8x32xf32>
    %148 = vector.extract_strided_slice %146 {offsets = [0, 32], sizes = [8, 32], strides = [1, 1]} : vector<8x128xf32> to vector<8x32xf32>
    %149 = vector.extract_strided_slice %146 {offsets = [0, 64], sizes = [8, 32], strides = [1, 1]} : vector<8x128xf32> to vector<8x32xf32>
    %cst_44 = arith.constant 2.000000e+00 : f32
    %150 = vector.broadcast %cst_44 : f32 to vector<8x32xf32>
    %151 = arith.mulf %150, %149 : vector<8x32xf32>
    %cst_45 = arith.constant 1.000000e+00 : f32
    %152 = vector.broadcast %cst_45 : f32 to vector<8x32xf32>
    %153 = arith.subf %151, %152 : vector<8x32xf32>
    %154 = vector.extract_strided_slice %146 {offsets = [0, 96], sizes = [8, 32], strides = [1, 1]} : vector<8x128xf32> to vector<8x32xf32>
    %155 = arith.mulf %148, %94 : vector<8x32xf32>
    %156 = arith.mulf %147, %153 : vector<8x32xf32>
    %157 = arith.addf %155, %156 : vector<8x32xf32>
    %cst_46 = arith.constant 2.000000e+00 : f32
    %158 = vector.broadcast %cst_46 : f32 to vector<8x32xf32>
    %159 = arith.mulf %158, %157 : vector<8x32xf32>
    %160 = arith.negf %159 : vector<8x32xf32>
    %161 = math.exp %160 : vector<8x32xf32>
    %cst_47 = arith.constant 1.000000e+00 : f32
    %162 = vector.broadcast %cst_47 : f32 to vector<8x32xf32>
    %163 = arith.addf %162, %161 : vector<8x32xf32>
    %164 = arith.divf %162, %163 : vector<8x32xf32>
    %cst_48 = arith.constant 2.000000e+00 : f32
    %165 = vector.broadcast %cst_48 : f32 to vector<8x32xf32>
    %166 = arith.mulf %165, %164 : vector<8x32xf32>
    %cst_49 = arith.constant 1.000000e+00 : f32
    %167 = vector.broadcast %cst_49 : f32 to vector<8x32xf32>
    %168 = arith.subf %166, %167 : vector<8x32xf32>
    %169 = arith.mulf %154, %168 : vector<8x32xf32>
    %170 = tpu.concatenate %169, %139 in 1 : vector<8x32xf32>, vector<8x32xf32> -> vector<8x64xf32>
    %cst_50 = arith.constant dense<0.000000e+00> : vector<8x256xf32>
    %171 = tpu.matmul %170, %0, %cst_50 {dimension_numbers = #tpu.dot_dimension_numbers<[1], [0], [0], [1], [0, 0, 1, 1], [], []>} : vector<8x64xf32>, vector<64x256xf32>, vector<8x256xf32> -> vector<8x256xf32>
    %172 = vector.extract_strided_slice %171 {offsets = [0, 0], sizes = [8, 128], strides = [1, 1]} : vector<8x256xf32> to vector<8x128xf32>
    %173 = arith.addf %172, %9 : vector<8x128xf32>
    %174 = vector.extract_strided_slice %171 {offsets = [0, 128], sizes = [8, 128], strides = [1, 1]} : vector<8x256xf32> to vector<8x128xf32>
    %175 = arith.negf %173 : vector<8x128xf32>
    %176 = math.exp %175 : vector<8x128xf32>
    %cst_51 = arith.constant 1.000000e+00 : f32
    %177 = vector.broadcast %cst_51 : f32 to vector<8x128xf32>
    %178 = arith.addf %177, %176 : vector<8x128xf32>
    %179 = arith.divf %177, %178 : vector<8x128xf32>
    %180 = vector.extract_strided_slice %179 {offsets = [0, 0], sizes = [8, 32], strides = [1, 1]} : vector<8x128xf32> to vector<8x32xf32>
    %181 = vector.extract_strided_slice %179 {offsets = [0, 32], sizes = [8, 32], strides = [1, 1]} : vector<8x128xf32> to vector<8x32xf32>
    %182 = vector.extract_strided_slice %179 {offsets = [0, 64], sizes = [8, 32], strides = [1, 1]} : vector<8x128xf32> to vector<8x32xf32>
    %cst_52 = arith.constant 2.000000e+00 : f32
    %183 = vector.broadcast %cst_52 : f32 to vector<8x32xf32>
    %184 = arith.mulf %183, %182 : vector<8x32xf32>
    %cst_53 = arith.constant 1.000000e+00 : f32
    %185 = vector.broadcast %cst_53 : f32 to vector<8x32xf32>
    %186 = arith.subf %184, %185 : vector<8x32xf32>
    %187 = vector.extract_strided_slice %179 {offsets = [0, 96], sizes = [8, 32], strides = [1, 1]} : vector<8x128xf32> to vector<8x32xf32>
    %188 = arith.mulf %181, %127 : vector<8x32xf32>
    %189 = arith.mulf %180, %186 : vector<8x32xf32>
    %190 = arith.addf %188, %189 : vector<8x32xf32>
    %cst_54 = arith.constant 2.000000e+00 : f32
    %191 = vector.broadcast %cst_54 : f32 to vector<8x32xf32>
    %192 = arith.mulf %191, %190 : vector<8x32xf32>
    %193 = arith.negf %192 : vector<8x32xf32>
    %194 = math.exp %193 : vector<8x32xf32>
    %cst_55 = arith.constant 1.000000e+00 : f32
    %195 = vector.broadcast %cst_55 : f32 to vector<8x32xf32>
    %196 = arith.addf %195, %194 : vector<8x32xf32>
    %197 = arith.divf %195, %196 : vector<8x32xf32>
    %cst_56 = arith.constant 2.000000e+00 : f32
    %198 = vector.broadcast %cst_56 : f32 to vector<8x32xf32>
    %199 = arith.mulf %198, %197 : vector<8x32xf32>
    %cst_57 = arith.constant 1.000000e+00 : f32
    %200 = vector.broadcast %cst_57 : f32 to vector<8x32xf32>
    %201 = arith.subf %199, %200 : vector<8x32xf32>
    %202 = arith.mulf %187, %201 : vector<8x32xf32>
    %203 = vector.extract_strided_slice %6 {offsets = [24, 0], sizes = [8, 128], strides = [1, 1]} : vector<64x128xf32> to vector<8x128xf32>
    %204 = arith.addf %203, %174 : vector<8x128xf32>
    %205 = arith.negf %204 : vector<8x128xf32>
    %206 = math.exp %205 : vector<8x128xf32>
    %cst_58 = arith.constant 1.000000e+00 : f32
    %207 = vector.broadcast %cst_58 : f32 to vector<8x128xf32>
    %208 = arith.addf %207, %206 : vector<8x128xf32>
    %209 = arith.divf %207, %208 : vector<8x128xf32>
    %210 = vector.extract_strided_slice %209 {offsets = [0, 0], sizes = [8, 32], strides = [1, 1]} : vector<8x128xf32> to vector<8x32xf32>
    %211 = vector.extract_strided_slice %209 {offsets = [0, 32], sizes = [8, 32], strides = [1, 1]} : vector<8x128xf32> to vector<8x32xf32>
    %212 = vector.extract_strided_slice %209 {offsets = [0, 64], sizes = [8, 32], strides = [1, 1]} : vector<8x128xf32> to vector<8x32xf32>
    %cst_59 = arith.constant 2.000000e+00 : f32
    %213 = vector.broadcast %cst_59 : f32 to vector<8x32xf32>
    %214 = arith.mulf %213, %212 : vector<8x32xf32>
    %cst_60 = arith.constant 1.000000e+00 : f32
    %215 = vector.broadcast %cst_60 : f32 to vector<8x32xf32>
    %216 = arith.subf %214, %215 : vector<8x32xf32>
    %217 = vector.extract_strided_slice %209 {offsets = [0, 96], sizes = [8, 32], strides = [1, 1]} : vector<8x128xf32> to vector<8x32xf32>
    %218 = arith.mulf %211, %157 : vector<8x32xf32>
    %219 = arith.mulf %210, %216 : vector<8x32xf32>
    %220 = arith.addf %218, %219 : vector<8x32xf32>
    %cst_61 = arith.constant 2.000000e+00 : f32
    %221 = vector.broadcast %cst_61 : f32 to vector<8x32xf32>
    %222 = arith.mulf %221, %220 : vector<8x32xf32>
    %223 = arith.negf %222 : vector<8x32xf32>
    %224 = math.exp %223 : vector<8x32xf32>
    %cst_62 = arith.constant 1.000000e+00 : f32
    %225 = vector.broadcast %cst_62 : f32 to vector<8x32xf32>
    %226 = arith.addf %225, %224 : vector<8x32xf32>
    %227 = arith.divf %225, %226 : vector<8x32xf32>
    %cst_63 = arith.constant 2.000000e+00 : f32
    %228 = vector.broadcast %cst_63 : f32 to vector<8x32xf32>
    %229 = arith.mulf %228, %227 : vector<8x32xf32>
    %cst_64 = arith.constant 1.000000e+00 : f32
    %230 = vector.broadcast %cst_64 : f32 to vector<8x32xf32>
    %231 = arith.subf %229, %230 : vector<8x32xf32>
    %232 = arith.mulf %217, %231 : vector<8x32xf32>
    %233 = tpu.concatenate %232, %202 in 1 : vector<8x32xf32>, vector<8x32xf32> -> vector<8x64xf32>
    %cst_65 = arith.constant dense<0.000000e+00> : vector<8x256xf32>
    %234 = tpu.matmul %233, %0, %cst_65 {dimension_numbers = #tpu.dot_dimension_numbers<[1], [0], [0], [1], [0, 0, 1, 1], [], []>} : vector<8x64xf32>, vector<64x256xf32>, vector<8x256xf32> -> vector<8x256xf32>
    %235 = vector.extract_strided_slice %234 {offsets = [0, 0], sizes = [8, 128], strides = [1, 1]} : vector<8x256xf32> to vector<8x128xf32>
    %236 = arith.addf %235, %9 : vector<8x128xf32>
    %237 = vector.extract_strided_slice %234 {offsets = [0, 128], sizes = [8, 128], strides = [1, 1]} : vector<8x256xf32> to vector<8x128xf32>
    %238 = arith.negf %236 : vector<8x128xf32>
    %239 = math.exp %238 : vector<8x128xf32>
    %cst_66 = arith.constant 1.000000e+00 : f32
    %240 = vector.broadcast %cst_66 : f32 to vector<8x128xf32>
    %241 = arith.addf %240, %239 : vector<8x128xf32>
    %242 = arith.divf %240, %241 : vector<8x128xf32>
    %243 = vector.extract_strided_slice %242 {offsets = [0, 0], sizes = [8, 32], strides = [1, 1]} : vector<8x128xf32> to vector<8x32xf32>
    %244 = vector.extract_strided_slice %242 {offsets = [0, 32], sizes = [8, 32], strides = [1, 1]} : vector<8x128xf32> to vector<8x32xf32>
    %245 = vector.extract_strided_slice %242 {offsets = [0, 64], sizes = [8, 32], strides = [1, 1]} : vector<8x128xf32> to vector<8x32xf32>
    %cst_67 = arith.constant 2.000000e+00 : f32
    %246 = vector.broadcast %cst_67 : f32 to vector<8x32xf32>
    %247 = arith.mulf %246, %245 : vector<8x32xf32>
    %cst_68 = arith.constant 1.000000e+00 : f32
    %248 = vector.broadcast %cst_68 : f32 to vector<8x32xf32>
    %249 = arith.subf %247, %248 : vector<8x32xf32>
    %250 = vector.extract_strided_slice %242 {offsets = [0, 96], sizes = [8, 32], strides = [1, 1]} : vector<8x128xf32> to vector<8x32xf32>
    %251 = arith.mulf %244, %190 : vector<8x32xf32>
    %252 = arith.mulf %243, %249 : vector<8x32xf32>
    %253 = arith.addf %251, %252 : vector<8x32xf32>
    %cst_69 = arith.constant 2.000000e+00 : f32
    %254 = vector.broadcast %cst_69 : f32 to vector<8x32xf32>
    %255 = arith.mulf %254, %253 : vector<8x32xf32>
    %256 = arith.negf %255 : vector<8x32xf32>
    %257 = math.exp %256 : vector<8x32xf32>
    %cst_70 = arith.constant 1.000000e+00 : f32
    %258 = vector.broadcast %cst_70 : f32 to vector<8x32xf32>
    %259 = arith.addf %258, %257 : vector<8x32xf32>
    %260 = arith.divf %258, %259 : vector<8x32xf32>
    %cst_71 = arith.constant 2.000000e+00 : f32
    %261 = vector.broadcast %cst_71 : f32 to vector<8x32xf32>
    %262 = arith.mulf %261, %260 : vector<8x32xf32>
    %cst_72 = arith.constant 1.000000e+00 : f32
    %263 = vector.broadcast %cst_72 : f32 to vector<8x32xf32>
    %264 = arith.subf %262, %263 : vector<8x32xf32>
    %265 = arith.mulf %250, %264 : vector<8x32xf32>
    %266 = vector.extract_strided_slice %6 {offsets = [32, 0], sizes = [8, 128], strides = [1, 1]} : vector<64x128xf32> to vector<8x128xf32>
    %267 = arith.addf %266, %237 : vector<8x128xf32>
    %268 = arith.negf %267 : vector<8x128xf32>
    %269 = math.exp %268 : vector<8x128xf32>
    %cst_73 = arith.constant 1.000000e+00 : f32
    %270 = vector.broadcast %cst_73 : f32 to vector<8x128xf32>
    %271 = arith.addf %270, %269 : vector<8x128xf32>
    %272 = arith.divf %270, %271 : vector<8x128xf32>
    %273 = vector.extract_strided_slice %272 {offsets = [0, 0], sizes = [8, 32], strides = [1, 1]} : vector<8x128xf32> to vector<8x32xf32>
    %274 = vector.extract_strided_slice %272 {offsets = [0, 32], sizes = [8, 32], strides = [1, 1]} : vector<8x128xf32> to vector<8x32xf32>
    %275 = vector.extract_strided_slice %272 {offsets = [0, 64], sizes = [8, 32], strides = [1, 1]} : vector<8x128xf32> to vector<8x32xf32>
    %cst_74 = arith.constant 2.000000e+00 : f32
    %276 = vector.broadcast %cst_74 : f32 to vector<8x32xf32>
    %277 = arith.mulf %276, %275 : vector<8x32xf32>
    %cst_75 = arith.constant 1.000000e+00 : f32
    %278 = vector.broadcast %cst_75 : f32 to vector<8x32xf32>
    %279 = arith.subf %277, %278 : vector<8x32xf32>
    %280 = vector.extract_strided_slice %272 {offsets = [0, 96], sizes = [8, 32], strides = [1, 1]} : vector<8x128xf32> to vector<8x32xf32>
    %281 = arith.mulf %274, %220 : vector<8x32xf32>
    %282 = arith.mulf %273, %279 : vector<8x32xf32>
    %283 = arith.addf %281, %282 : vector<8x32xf32>
    %cst_76 = arith.constant 2.000000e+00 : f32
    %284 = vector.broadcast %cst_76 : f32 to vector<8x32xf32>
    %285 = arith.mulf %284, %283 : vector<8x32xf32>
    %286 = arith.negf %285 : vector<8x32xf32>
    %287 = math.exp %286 : vector<8x32xf32>
    %cst_77 = arith.constant 1.000000e+00 : f32
    %288 = vector.broadcast %cst_77 : f32 to vector<8x32xf32>
    %289 = arith.addf %288, %287 : vector<8x32xf32>
    %290 = arith.divf %288, %289 : vector<8x32xf32>
    %cst_78 = arith.constant 2.000000e+00 : f32
    %291 = vector.broadcast %cst_78 : f32 to vector<8x32xf32>
    %292 = arith.mulf %291, %290 : vector<8x32xf32>
    %cst_79 = arith.constant 1.000000e+00 : f32
    %293 = vector.broadcast %cst_79 : f32 to vector<8x32xf32>
    %294 = arith.subf %292, %293 : vector<8x32xf32>
    %295 = arith.mulf %280, %294 : vector<8x32xf32>
    %296 = tpu.concatenate %295, %265 in 1 : vector<8x32xf32>, vector<8x32xf32> -> vector<8x64xf32>
    %cst_80 = arith.constant dense<0.000000e+00> : vector<8x256xf32>
    %297 = tpu.matmul %296, %0, %cst_80 {dimension_numbers = #tpu.dot_dimension_numbers<[1], [0], [0], [1], [0, 0, 1, 1], [], []>} : vector<8x64xf32>, vector<64x256xf32>, vector<8x256xf32> -> vector<8x256xf32>
    %298 = vector.extract_strided_slice %297 {offsets = [0, 0], sizes = [8, 128], strides = [1, 1]} : vector<8x256xf32> to vector<8x128xf32>
    %299 = arith.addf %298, %9 : vector<8x128xf32>
    %300 = vector.extract_strided_slice %297 {offsets = [0, 128], sizes = [8, 128], strides = [1, 1]} : vector<8x256xf32> to vector<8x128xf32>
    %301 = arith.negf %299 : vector<8x128xf32>
    %302 = math.exp %301 : vector<8x128xf32>
    %cst_81 = arith.constant 1.000000e+00 : f32
    %303 = vector.broadcast %cst_81 : f32 to vector<8x128xf32>
    %304 = arith.addf %303, %302 : vector<8x128xf32>
    %305 = arith.divf %303, %304 : vector<8x128xf32>
    %306 = vector.extract_strided_slice %305 {offsets = [0, 0], sizes = [8, 32], strides = [1, 1]} : vector<8x128xf32> to vector<8x32xf32>
    %307 = vector.extract_strided_slice %305 {offsets = [0, 32], sizes = [8, 32], strides = [1, 1]} : vector<8x128xf32> to vector<8x32xf32>
    %308 = vector.extract_strided_slice %305 {offsets = [0, 64], sizes = [8, 32], strides = [1, 1]} : vector<8x128xf32> to vector<8x32xf32>
    %cst_82 = arith.constant 2.000000e+00 : f32
    %309 = vector.broadcast %cst_82 : f32 to vector<8x32xf32>
    %310 = arith.mulf %309, %308 : vector<8x32xf32>
    %cst_83 = arith.constant 1.000000e+00 : f32
    %311 = vector.broadcast %cst_83 : f32 to vector<8x32xf32>
    %312 = arith.subf %310, %311 : vector<8x32xf32>
    %313 = vector.extract_strided_slice %305 {offsets = [0, 96], sizes = [8, 32], strides = [1, 1]} : vector<8x128xf32> to vector<8x32xf32>
    %314 = arith.mulf %307, %253 : vector<8x32xf32>
    %315 = arith.mulf %306, %312 : vector<8x32xf32>
    %316 = arith.addf %314, %315 : vector<8x32xf32>
    %cst_84 = arith.constant 2.000000e+00 : f32
    %317 = vector.broadcast %cst_84 : f32 to vector<8x32xf32>
    %318 = arith.mulf %317, %316 : vector<8x32xf32>
    %319 = arith.negf %318 : vector<8x32xf32>
    %320 = math.exp %319 : vector<8x32xf32>
    %cst_85 = arith.constant 1.000000e+00 : f32
    %321 = vector.broadcast %cst_85 : f32 to vector<8x32xf32>
    %322 = arith.addf %321, %320 : vector<8x32xf32>
    %323 = arith.divf %321, %322 : vector<8x32xf32>
    %cst_86 = arith.constant 2.000000e+00 : f32
    %324 = vector.broadcast %cst_86 : f32 to vector<8x32xf32>
    %325 = arith.mulf %324, %323 : vector<8x32xf32>
    %cst_87 = arith.constant 1.000000e+00 : f32
    %326 = vector.broadcast %cst_87 : f32 to vector<8x32xf32>
    %327 = arith.subf %325, %326 : vector<8x32xf32>
    %328 = arith.mulf %313, %327 : vector<8x32xf32>
    %329 = vector.extract_strided_slice %6 {offsets = [40, 0], sizes = [8, 128], strides = [1, 1]} : vector<64x128xf32> to vector<8x128xf32>
    %330 = arith.addf %329, %300 : vector<8x128xf32>
    %331 = arith.negf %330 : vector<8x128xf32>
    %332 = math.exp %331 : vector<8x128xf32>
    %cst_88 = arith.constant 1.000000e+00 : f32
    %333 = vector.broadcast %cst_88 : f32 to vector<8x128xf32>
    %334 = arith.addf %333, %332 : vector<8x128xf32>
    %335 = arith.divf %333, %334 : vector<8x128xf32>
    %336 = vector.extract_strided_slice %335 {offsets = [0, 0], sizes = [8, 32], strides = [1, 1]} : vector<8x128xf32> to vector<8x32xf32>
    %337 = vector.extract_strided_slice %335 {offsets = [0, 32], sizes = [8, 32], strides = [1, 1]} : vector<8x128xf32> to vector<8x32xf32>
    %338 = vector.extract_strided_slice %335 {offsets = [0, 64], sizes = [8, 32], strides = [1, 1]} : vector<8x128xf32> to vector<8x32xf32>
    %cst_89 = arith.constant 2.000000e+00 : f32
    %339 = vector.broadcast %cst_89 : f32 to vector<8x32xf32>
    %340 = arith.mulf %339, %338 : vector<8x32xf32>
    %cst_90 = arith.constant 1.000000e+00 : f32
    %341 = vector.broadcast %cst_90 : f32 to vector<8x32xf32>
    %342 = arith.subf %340, %341 : vector<8x32xf32>
    %343 = vector.extract_strided_slice %335 {offsets = [0, 96], sizes = [8, 32], strides = [1, 1]} : vector<8x128xf32> to vector<8x32xf32>
    %344 = arith.mulf %337, %283 : vector<8x32xf32>
    %345 = arith.mulf %336, %342 : vector<8x32xf32>
    %346 = arith.addf %344, %345 : vector<8x32xf32>
    %cst_91 = arith.constant 2.000000e+00 : f32
    %347 = vector.broadcast %cst_91 : f32 to vector<8x32xf32>
    %348 = arith.mulf %347, %346 : vector<8x32xf32>
    %349 = arith.negf %348 : vector<8x32xf32>
    %350 = math.exp %349 : vector<8x32xf32>
    %cst_92 = arith.constant 1.000000e+00 : f32
    %351 = vector.broadcast %cst_92 : f32 to vector<8x32xf32>
    %352 = arith.addf %351, %350 : vector<8x32xf32>
    %353 = arith.divf %351, %352 : vector<8x32xf32>
    %cst_93 = arith.constant 2.000000e+00 : f32
    %354 = vector.broadcast %cst_93 : f32 to vector<8x32xf32>
    %355 = arith.mulf %354, %353 : vector<8x32xf32>
    %cst_94 = arith.constant 1.000000e+00 : f32
    %356 = vector.broadcast %cst_94 : f32 to vector<8x32xf32>
    %357 = arith.subf %355, %356 : vector<8x32xf32>
    %358 = arith.mulf %343, %357 : vector<8x32xf32>
    %359 = tpu.concatenate %358, %328 in 1 : vector<8x32xf32>, vector<8x32xf32> -> vector<8x64xf32>
    %cst_95 = arith.constant dense<0.000000e+00> : vector<8x256xf32>
    %360 = tpu.matmul %359, %0, %cst_95 {dimension_numbers = #tpu.dot_dimension_numbers<[1], [0], [0], [1], [0, 0, 1, 1], [], []>} : vector<8x64xf32>, vector<64x256xf32>, vector<8x256xf32> -> vector<8x256xf32>
    %361 = vector.extract_strided_slice %360 {offsets = [0, 0], sizes = [8, 128], strides = [1, 1]} : vector<8x256xf32> to vector<8x128xf32>
    %362 = arith.addf %361, %9 : vector<8x128xf32>
    %363 = vector.extract_strided_slice %360 {offsets = [0, 128], sizes = [8, 128], strides = [1, 1]} : vector<8x256xf32> to vector<8x128xf32>
    %364 = arith.negf %362 : vector<8x128xf32>
    %365 = math.exp %364 : vector<8x128xf32>
    %cst_96 = arith.constant 1.000000e+00 : f32
    %366 = vector.broadcast %cst_96 : f32 to vector<8x128xf32>
    %367 = arith.addf %366, %365 : vector<8x128xf32>
    %368 = arith.divf %366, %367 : vector<8x128xf32>
    %369 = vector.extract_strided_slice %368 {offsets = [0, 0], sizes = [8, 32], strides = [1, 1]} : vector<8x128xf32> to vector<8x32xf32>
    %370 = vector.extract_strided_slice %368 {offsets = [0, 32], sizes = [8, 32], strides = [1, 1]} : vector<8x128xf32> to vector<8x32xf32>
    %371 = vector.extract_strided_slice %368 {offsets = [0, 64], sizes = [8, 32], strides = [1, 1]} : vector<8x128xf32> to vector<8x32xf32>
    %cst_97 = arith.constant 2.000000e+00 : f32
    %372 = vector.broadcast %cst_97 : f32 to vector<8x32xf32>
    %373 = arith.mulf %372, %371 : vector<8x32xf32>
    %cst_98 = arith.constant 1.000000e+00 : f32
    %374 = vector.broadcast %cst_98 : f32 to vector<8x32xf32>
    %375 = arith.subf %373, %374 : vector<8x32xf32>
    %376 = vector.extract_strided_slice %368 {offsets = [0, 96], sizes = [8, 32], strides = [1, 1]} : vector<8x128xf32> to vector<8x32xf32>
    %377 = arith.mulf %370, %316 : vector<8x32xf32>
    %378 = arith.mulf %369, %375 : vector<8x32xf32>
    %379 = arith.addf %377, %378 : vector<8x32xf32>
    %cst_99 = arith.constant 2.000000e+00 : f32
    %380 = vector.broadcast %cst_99 : f32 to vector<8x32xf32>
    %381 = arith.mulf %380, %379 : vector<8x32xf32>
    %382 = arith.negf %381 : vector<8x32xf32>
    %383 = math.exp %382 : vector<8x32xf32>
    %cst_100 = arith.constant 1.000000e+00 : f32
    %384 = vector.broadcast %cst_100 : f32 to vector<8x32xf32>
    %385 = arith.addf %384, %383 : vector<8x32xf32>
    %386 = arith.divf %384, %385 : vector<8x32xf32>
    %cst_101 = arith.constant 2.000000e+00 : f32
    %387 = vector.broadcast %cst_101 : f32 to vector<8x32xf32>
    %388 = arith.mulf %387, %386 : vector<8x32xf32>
    %cst_102 = arith.constant 1.000000e+00 : f32
    %389 = vector.broadcast %cst_102 : f32 to vector<8x32xf32>
    %390 = arith.subf %388, %389 : vector<8x32xf32>
    %391 = arith.mulf %376, %390 : vector<8x32xf32>
    %392 = vector.extract_strided_slice %6 {offsets = [48, 0], sizes = [8, 128], strides = [1, 1]} : vector<64x128xf32> to vector<8x128xf32>
    %393 = arith.addf %392, %363 : vector<8x128xf32>
    %394 = arith.negf %393 : vector<8x128xf32>
    %395 = math.exp %394 : vector<8x128xf32>
    %cst_103 = arith.constant 1.000000e+00 : f32
    %396 = vector.broadcast %cst_103 : f32 to vector<8x128xf32>
    %397 = arith.addf %396, %395 : vector<8x128xf32>
    %398 = arith.divf %396, %397 : vector<8x128xf32>
    %399 = vector.extract_strided_slice %398 {offsets = [0, 0], sizes = [8, 32], strides = [1, 1]} : vector<8x128xf32> to vector<8x32xf32>
    %400 = vector.extract_strided_slice %398 {offsets = [0, 32], sizes = [8, 32], strides = [1, 1]} : vector<8x128xf32> to vector<8x32xf32>
    %401 = vector.extract_strided_slice %398 {offsets = [0, 64], sizes = [8, 32], strides = [1, 1]} : vector<8x128xf32> to vector<8x32xf32>
    %cst_104 = arith.constant 2.000000e+00 : f32
    %402 = vector.broadcast %cst_104 : f32 to vector<8x32xf32>
    %403 = arith.mulf %402, %401 : vector<8x32xf32>
    %cst_105 = arith.constant 1.000000e+00 : f32
    %404 = vector.broadcast %cst_105 : f32 to vector<8x32xf32>
    %405 = arith.subf %403, %404 : vector<8x32xf32>
    %406 = vector.extract_strided_slice %398 {offsets = [0, 96], sizes = [8, 32], strides = [1, 1]} : vector<8x128xf32> to vector<8x32xf32>
    %407 = arith.mulf %400, %346 : vector<8x32xf32>
    %408 = arith.mulf %399, %405 : vector<8x32xf32>
    %409 = arith.addf %407, %408 : vector<8x32xf32>
    %cst_106 = arith.constant 2.000000e+00 : f32
    %410 = vector.broadcast %cst_106 : f32 to vector<8x32xf32>
    %411 = arith.mulf %410, %409 : vector<8x32xf32>
    %412 = arith.negf %411 : vector<8x32xf32>
    %413 = math.exp %412 : vector<8x32xf32>
    %cst_107 = arith.constant 1.000000e+00 : f32
    %414 = vector.broadcast %cst_107 : f32 to vector<8x32xf32>
    %415 = arith.addf %414, %413 : vector<8x32xf32>
    %416 = arith.divf %414, %415 : vector<8x32xf32>
    %cst_108 = arith.constant 2.000000e+00 : f32
    %417 = vector.broadcast %cst_108 : f32 to vector<8x32xf32>
    %418 = arith.mulf %417, %416 : vector<8x32xf32>
    %cst_109 = arith.constant 1.000000e+00 : f32
    %419 = vector.broadcast %cst_109 : f32 to vector<8x32xf32>
    %420 = arith.subf %418, %419 : vector<8x32xf32>
    %421 = arith.mulf %406, %420 : vector<8x32xf32>
    %422 = tpu.concatenate %421, %391 in 1 : vector<8x32xf32>, vector<8x32xf32> -> vector<8x64xf32>
    %cst_110 = arith.constant dense<0.000000e+00> : vector<8x256xf32>
    %423 = tpu.matmul %422, %0, %cst_110 {dimension_numbers = #tpu.dot_dimension_numbers<[1], [0], [0], [1], [0, 0, 1, 1], [], []>} : vector<8x64xf32>, vector<64x256xf32>, vector<8x256xf32> -> vector<8x256xf32>
    %424 = vector.extract_strided_slice %423 {offsets = [0, 0], sizes = [8, 128], strides = [1, 1]} : vector<8x256xf32> to vector<8x128xf32>
    %425 = arith.addf %424, %9 : vector<8x128xf32>
    %426 = vector.extract_strided_slice %423 {offsets = [0, 128], sizes = [8, 128], strides = [1, 1]} : vector<8x256xf32> to vector<8x128xf32>
    %427 = arith.negf %425 : vector<8x128xf32>
    %428 = math.exp %427 : vector<8x128xf32>
    %cst_111 = arith.constant 1.000000e+00 : f32
    %429 = vector.broadcast %cst_111 : f32 to vector<8x128xf32>
    %430 = arith.addf %429, %428 : vector<8x128xf32>
    %431 = arith.divf %429, %430 : vector<8x128xf32>
    %432 = vector.extract_strided_slice %431 {offsets = [0, 0], sizes = [8, 32], strides = [1, 1]} : vector<8x128xf32> to vector<8x32xf32>
    %433 = vector.extract_strided_slice %431 {offsets = [0, 32], sizes = [8, 32], strides = [1, 1]} : vector<8x128xf32> to vector<8x32xf32>
    %434 = vector.extract_strided_slice %431 {offsets = [0, 64], sizes = [8, 32], strides = [1, 1]} : vector<8x128xf32> to vector<8x32xf32>
    %cst_112 = arith.constant 2.000000e+00 : f32
    %435 = vector.broadcast %cst_112 : f32 to vector<8x32xf32>
    %436 = arith.mulf %435, %434 : vector<8x32xf32>
    %cst_113 = arith.constant 1.000000e+00 : f32
    %437 = vector.broadcast %cst_113 : f32 to vector<8x32xf32>
    %438 = arith.subf %436, %437 : vector<8x32xf32>
    %439 = vector.extract_strided_slice %431 {offsets = [0, 96], sizes = [8, 32], strides = [1, 1]} : vector<8x128xf32> to vector<8x32xf32>
    %440 = arith.mulf %433, %379 : vector<8x32xf32>
    %441 = arith.mulf %432, %438 : vector<8x32xf32>
    %442 = arith.addf %440, %441 : vector<8x32xf32>
    %cst_114 = arith.constant 2.000000e+00 : f32
    %443 = vector.broadcast %cst_114 : f32 to vector<8x32xf32>
    %444 = arith.mulf %443, %442 : vector<8x32xf32>
    %445 = arith.negf %444 : vector<8x32xf32>
    %446 = math.exp %445 : vector<8x32xf32>
    %cst_115 = arith.constant 1.000000e+00 : f32
    %447 = vector.broadcast %cst_115 : f32 to vector<8x32xf32>
    %448 = arith.addf %447, %446 : vector<8x32xf32>
    %449 = arith.divf %447, %448 : vector<8x32xf32>
    %cst_116 = arith.constant 2.000000e+00 : f32
    %450 = vector.broadcast %cst_116 : f32 to vector<8x32xf32>
    %451 = arith.mulf %450, %449 : vector<8x32xf32>
    %cst_117 = arith.constant 1.000000e+00 : f32
    %452 = vector.broadcast %cst_117 : f32 to vector<8x32xf32>
    %453 = arith.subf %451, %452 : vector<8x32xf32>
    %454 = arith.mulf %439, %453 : vector<8x32xf32>
    %455 = vector.extract_strided_slice %6 {offsets = [56, 0], sizes = [8, 128], strides = [1, 1]} : vector<64x128xf32> to vector<8x128xf32>
    %456 = arith.addf %455, %426 : vector<8x128xf32>
    %457 = arith.negf %456 : vector<8x128xf32>
    %458 = math.exp %457 : vector<8x128xf32>
    %cst_118 = arith.constant 1.000000e+00 : f32
    %459 = vector.broadcast %cst_118 : f32 to vector<8x128xf32>
    %460 = arith.addf %459, %458 : vector<8x128xf32>
    %461 = arith.divf %459, %460 : vector<8x128xf32>
    %462 = vector.extract_strided_slice %461 {offsets = [0, 0], sizes = [8, 32], strides = [1, 1]} : vector<8x128xf32> to vector<8x32xf32>
    %463 = vector.extract_strided_slice %461 {offsets = [0, 32], sizes = [8, 32], strides = [1, 1]} : vector<8x128xf32> to vector<8x32xf32>
    %464 = vector.extract_strided_slice %461 {offsets = [0, 64], sizes = [8, 32], strides = [1, 1]} : vector<8x128xf32> to vector<8x32xf32>
    %cst_119 = arith.constant 2.000000e+00 : f32
    %465 = vector.broadcast %cst_119 : f32 to vector<8x32xf32>
    %466 = arith.mulf %465, %464 : vector<8x32xf32>
    %cst_120 = arith.constant 1.000000e+00 : f32
    %467 = vector.broadcast %cst_120 : f32 to vector<8x32xf32>
    %468 = arith.subf %466, %467 : vector<8x32xf32>
    %469 = vector.extract_strided_slice %461 {offsets = [0, 96], sizes = [8, 32], strides = [1, 1]} : vector<8x128xf32> to vector<8x32xf32>
    %470 = arith.mulf %463, %409 : vector<8x32xf32>
    %471 = arith.mulf %462, %468 : vector<8x32xf32>
    %472 = arith.addf %470, %471 : vector<8x32xf32>
    %cst_121 = arith.constant 2.000000e+00 : f32
    %473 = vector.broadcast %cst_121 : f32 to vector<8x32xf32>
    %474 = arith.mulf %473, %472 : vector<8x32xf32>
    %475 = arith.negf %474 : vector<8x32xf32>
    %476 = math.exp %475 : vector<8x32xf32>
    %cst_122 = arith.constant 1.000000e+00 : f32
    %477 = vector.broadcast %cst_122 : f32 to vector<8x32xf32>
    %478 = arith.addf %477, %476 : vector<8x32xf32>
    %479 = arith.divf %477, %478 : vector<8x32xf32>
    %cst_123 = arith.constant 2.000000e+00 : f32
    %480 = vector.broadcast %cst_123 : f32 to vector<8x32xf32>
    %481 = arith.mulf %480, %479 : vector<8x32xf32>
    %cst_124 = arith.constant 1.000000e+00 : f32
    %482 = vector.broadcast %cst_124 : f32 to vector<8x32xf32>
    %483 = arith.subf %481, %482 : vector<8x32xf32>
    %484 = arith.mulf %469, %483 : vector<8x32xf32>
    %485 = tpu.concatenate %484, %454 in 1 : vector<8x32xf32>, vector<8x32xf32> -> vector<8x64xf32>
    %cst_125 = arith.constant dense<0.000000e+00> : vector<8x256xf32>
    %486 = tpu.matmul %485, %0, %cst_125 {dimension_numbers = #tpu.dot_dimension_numbers<[1], [0], [0], [1], [0, 0, 1, 1], [], []>} : vector<8x64xf32>, vector<64x256xf32>, vector<8x256xf32> -> vector<8x256xf32>
    %487 = vector.extract_strided_slice %486 {offsets = [0, 0], sizes = [8, 128], strides = [1, 1]} : vector<8x256xf32> to vector<8x128xf32>
    %488 = arith.addf %487, %9 : vector<8x128xf32>
    %489 = arith.negf %488 : vector<8x128xf32>
    %490 = math.exp %489 : vector<8x128xf32>
    %cst_126 = arith.constant 1.000000e+00 : f32
    %491 = vector.broadcast %cst_126 : f32 to vector<8x128xf32>
    %492 = arith.addf %491, %490 : vector<8x128xf32>
    %493 = arith.divf %491, %492 : vector<8x128xf32>
    %494 = vector.extract_strided_slice %493 {offsets = [0, 0], sizes = [8, 32], strides = [1, 1]} : vector<8x128xf32> to vector<8x32xf32>
    %495 = vector.extract_strided_slice %493 {offsets = [0, 32], sizes = [8, 32], strides = [1, 1]} : vector<8x128xf32> to vector<8x32xf32>
    %496 = vector.extract_strided_slice %493 {offsets = [0, 64], sizes = [8, 32], strides = [1, 1]} : vector<8x128xf32> to vector<8x32xf32>
    %cst_127 = arith.constant 2.000000e+00 : f32
    %497 = vector.broadcast %cst_127 : f32 to vector<8x32xf32>
    %498 = arith.mulf %497, %496 : vector<8x32xf32>
    %cst_128 = arith.constant 1.000000e+00 : f32
    %499 = vector.broadcast %cst_128 : f32 to vector<8x32xf32>
    %500 = arith.subf %498, %499 : vector<8x32xf32>
    %501 = vector.extract_strided_slice %493 {offsets = [0, 96], sizes = [8, 32], strides = [1, 1]} : vector<8x128xf32> to vector<8x32xf32>
    %502 = arith.mulf %495, %442 : vector<8x32xf32>
    %503 = arith.mulf %494, %500 : vector<8x32xf32>
    %504 = arith.addf %502, %503 : vector<8x32xf32>
    %cst_129 = arith.constant 2.000000e+00 : f32
    %505 = vector.broadcast %cst_129 : f32 to vector<8x32xf32>
    %506 = arith.mulf %505, %504 : vector<8x32xf32>
    %507 = arith.negf %506 : vector<8x32xf32>
    %508 = math.exp %507 : vector<8x32xf32>
    %cst_130 = arith.constant 1.000000e+00 : f32
    %509 = vector.broadcast %cst_130 : f32 to vector<8x32xf32>
    %510 = arith.addf %509, %508 : vector<8x32xf32>
    %511 = arith.divf %509, %510 : vector<8x32xf32>
    %cst_131 = arith.constant 2.000000e+00 : f32
    %512 = vector.broadcast %cst_131 : f32 to vector<8x32xf32>
    %513 = arith.mulf %512, %511 : vector<8x32xf32>
    %cst_132 = arith.constant 1.000000e+00 : f32
    %514 = vector.broadcast %cst_132 : f32 to vector<8x32xf32>
    %515 = arith.subf %513, %514 : vector<8x32xf32>
    %516 = arith.mulf %501, %515 : vector<8x32xf32>
    %c0_133 = arith.constant 0 : index
    %c0_134 = arith.constant 0 : index
    %517 = vector.load %arg1[%c0_133, %c0_134] : memref<8x32xf32, #tpu.memory_space<vmem>>, vector<8x32xf32>
    %518 = tpu.concatenate %516, %517 in 1 : vector<8x32xf32>, vector<8x32xf32> -> vector<8x64xf32>
    %c0_135 = arith.constant 0 : index
    %c0_136 = arith.constant 0 : index
    %519 = vector.load %arg6[%c0_135, %c0_136] : memref<64x32xf32, #tpu.memory_space<vmem>>, vector<64x32xf32>
    %cst_137 = arith.constant dense<0.000000e+00> : vector<8x32xf32>
    %520 = tpu.matmul %518, %519, %cst_137 {dimension_numbers = #tpu.dot_dimension_numbers<[1], [0], [0], [1], [0, 0, 1, 1], [], []>} : vector<8x64xf32>, vector<64x32xf32>, vector<8x32xf32> -> vector<8x32xf32>
    %c0_138 = arith.constant 0 : index
    %c0_139 = arith.constant 0 : index
    %521 = vector.load %arg7[%c0_138, %c0_139] : memref<1x32xf32, #tpu.memory_space<vmem>>, vector<1x32xf32>
    %522 = vector.broadcast %521 : vector<1x32xf32> to vector<8x32xf32>
    %523 = arith.addf %520, %522 : vector<8x32xf32>
    %cst_140 = arith.constant 0.000000e+00 : f32
    %524 = vector.broadcast %cst_140 : f32 to vector<8x32xf32>
    %525 = arith.maximumf %523, %524 : vector<8x32xf32>
    %c0_141 = arith.constant 0 : index
    %c0_142 = arith.constant 0 : index
    %526 = vector.load %arg8[%c0_141, %c0_142] : memref<32x16xf32, #tpu.memory_space<vmem>>, vector<32x16xf32>
    %cst_143 = arith.constant dense<0.000000e+00> : vector<8x16xf32>
    %527 = tpu.matmul %525, %526, %cst_143 {dimension_numbers = #tpu.dot_dimension_numbers<[1], [0], [0], [1], [0, 0, 1, 1], [], []>} : vector<8x32xf32>, vector<32x16xf32>, vector<8x16xf32> -> vector<8x16xf32>
    %c0_144 = arith.constant 0 : index
    %c0_145 = arith.constant 0 : index
    %528 = vector.load %arg9[%c0_144, %c0_145] : memref<1x16xf32, #tpu.memory_space<vmem>>, vector<1x16xf32>
    %529 = vector.broadcast %528 : vector<1x16xf32> to vector<8x16xf32>
    %530 = arith.addf %527, %529 : vector<8x16xf32>
    %cst_146 = arith.constant 0.000000e+00 : f32
    %531 = vector.broadcast %cst_146 : f32 to vector<8x16xf32>
    %532 = arith.maximumf %530, %531 : vector<8x16xf32>
    %c0_147 = arith.constant 0 : index
    %c0_148 = arith.constant 0 : index
    %533 = vector.load %arg10[%c0_147, %c0_148] : memref<16x128xf32, #tpu.memory_space<vmem>>, vector<16x128xf32>
    %cst_149 = arith.constant dense<0.000000e+00> : vector<8x128xf32>
    %534 = tpu.matmul %532, %533, %cst_149 {dimension_numbers = #tpu.dot_dimension_numbers<[1], [0], [0], [1], [0, 0, 1, 1], [], []>} : vector<8x16xf32>, vector<16x128xf32>, vector<8x128xf32> -> vector<8x128xf32>
    %c0_150 = arith.constant 0 : index
    %c0_151 = arith.constant 0 : index
    %535 = vector.load %arg11[%c0_150, %c0_151] : memref<1x128xf32, #tpu.memory_space<vmem>>, vector<1x128xf32>
    %536 = vector.broadcast %535 : vector<1x128xf32> to vector<8x128xf32>
    %537 = arith.addf %534, %536 : vector<8x128xf32>
    %538 = arith.negf %537 : vector<8x128xf32>
    %539 = math.exp %538 : vector<8x128xf32>
    %cst_152 = arith.constant 1.000000e+00 : f32
    %540 = vector.broadcast %cst_152 : f32 to vector<8x128xf32>
    %541 = arith.addf %540, %539 : vector<8x128xf32>
    %542 = arith.divf %540, %541 : vector<8x128xf32>
    %c0_153 = arith.constant 0 : index
    %c0_154 = arith.constant 0 : index
    %543 = vector.load %arg12[%c0_153, %c0_154] : memref<8x128xf32, #tpu.memory_space<vmem>>, vector<8x128xf32>
    tpu.vector_store %arg12[%c0_153, %c0_154], %542 {strides = array<i32>} : memref<8x128xf32, #tpu.memory_space<vmem>>, vector<8x128xf32>,
    return
  }
}

</mosaic_0001>

<llo_original>
// kernel: sequence_classification_forward.1
$region0: #{sequence_classification_forward.1}
  #allocation0 [shape = 'u32[]', space=smem, size = 0x4, offset = 0x4, fixed_abs, tag = 'smem constant byte address 0x4 - core index']
  #allocation1 [shape = 'u32[144,128]{1,0:T(1,128)}', space=vmem, size = 0x12000, scoped, tag = 'internal scratch']
  %s0 = inlined_call_operand.vmem [shape: f32[64,32], index: 0, kind: input, shape index: {}]
  %s1 = inlined_call_operand.vmem [shape: f32[8,32], index: 1, kind: input, shape index: {}]
  %s2 = inlined_call_operand.vmem [shape: f32[32,128], index: 2, kind: input, shape index: {}]
  %s3 = inlined_call_operand.vmem [shape: f32[1,128], index: 3, kind: input, shape index: {}]
  %s4 = inlined_call_operand.vmem [shape: f32[64,256], index: 4, kind: input, shape index: {}]
  %s5 = inlined_call_operand.vmem [shape: f32[1,128], index: 5, kind: input, shape index: {}]
  %s6 = inlined_call_operand.vmem [shape: f32[64,32], index: 6, kind: input, shape index: {}]
  %s7 = inlined_call_operand.vmem [shape: f32[1,32], index: 7, kind: input, shape index: {}]
  %s8 = inlined_call_operand.vmem [shape: f32[32,16], index: 8, kind: input, shape index: {}]
  %s9 = inlined_call_operand.vmem [shape: f32[1,16], index: 9, kind: input, shape index: {}]
  %s10 = inlined_call_operand.vmem [shape: f32[16,128], index: 10, kind: input, shape index: {}]
  %s11 = inlined_call_operand.vmem [shape: f32[1,128], index: 11, kind: input, shape index: {}]
  %s12 = inlined_call_operand.vmem [shape: f32[8,128], index: 12, kind: output, shape index: {}]
  %s13 = sld [smem:[#allocation0]]
  $region58: #{sequence_classification_forward.1} parent=0
    _
  %s15 = ssub.s32 1, %s13
  %s16 = scalar_select 0, %s15, %s13
  // Predicated region
  $region2: #{sequence_classification_forward.1} parent=0 // pred_check
    _
  $region3: #{sequence_classification_forward.1} parent=0 // pred_check_branch
    %18 = sbr.rel (0) target = $region5
  $region4: #{sequence_classification_forward.1} parent=0 // pred_region
    _
  $region5: #{sequence_classification_forward.1} parent=0 // pred_fallthru
    _
  // Predicated region
  $region6: #{sequence_classification_forward.1} parent=0 // pred_check
    _
  $region7: #{sequence_classification_forward.1} parent=0 // pred_check_branch
    %20 = sbr.rel (0) target = $region9
  $region8: #{sequence_classification_forward.1} parent=0 // pred_region
    _
  $region9: #{sequence_classification_forward.1} parent=0 // pred_fallthru
    _
  // Predicated region
  $region10: #{sequence_classification_forward.1} parent=0 // pred_check
    _
  $region11: #{sequence_classification_forward.1} parent=0 // pred_check_branch
    %22 = sbr.rel (0) target = $region13
  $region12: #{sequence_classification_forward.1} parent=0 // pred_region
    _
  $region13: #{sequence_classification_forward.1} parent=0 // pred_fallthru
    _
  // Predicated region
  $region14: #{sequence_classification_forward.1} parent=0 // pred_check
    _
  $region15: #{sequence_classification_forward.1} parent=0 // pred_check_branch
    %24 = sbr.rel (0) target = $region17
  $region16: #{sequence_classification_forward.1} parent=0 // pred_region
    _
  $region17: #{sequence_classification_forward.1} parent=0 // pred_fallthru
    _
  // Predicated region
  $region18: #{sequence_classification_forward.1} parent=0 // pred_check
    _
  $region19: #{sequence_classification_forward.1} parent=0 // pred_check_branch
    %26 = sbr.rel (0) target = $region21
  $region20: #{sequence_classification_forward.1} parent=0 // pred_region
    _
  $region21: #{sequence_classification_forward.1} parent=0 // pred_fallthru
    _
  // Predicated region
  $region22: #{sequence_classification_forward.1} parent=0 // pred_check
    _
  $region23: #{sequence_classification_forward.1} parent=0 // pred_check_branch
    %28 = sbr.rel (0) target = $region25
  $region24: #{sequence_classification_forward.1} parent=0 // pred_region
    _
  $region25: #{sequence_classification_forward.1} parent=0 // pred_fallthru
    _
  // Predicated region
  $region26: #{sequence_classification_forward.1} parent=0 // pred_check
    _
  $region27: #{sequence_classification_forward.1} parent=0 // pred_check_branch
    %30 = sbr.rel (0) target = $region29
  $region28: #{sequence_classification_forward.1} parent=0 // pred_region
    _
  $region29: #{sequence_classification_forward.1} parent=0 // pred_fallthru
    _
  // Predicated region
  $region30: #{sequence_classification_forward.1} parent=0 // pred_check
    _
  $region31: #{sequence_classification_forward.1} parent=0 // pred_check_branch
    %32 = sbr.rel (0) target = $region33
  $region32: #{sequence_classification_forward.1} parent=0 // pred_region
    _
  $region33: #{sequence_classification_forward.1} parent=0 // pred_fallthru
    _
  // Predicated region
  $region34: #{sequence_classification_forward.1} parent=0 // pred_check
    _
  $region35: #{sequence_classification_forward.1} parent=0 // pred_check_branch
    %34 = sbr.rel (0) target = $region37
  $region36: #{sequence_classification_forward.1} parent=0 // pred_region
    _
  $region37: #{sequence_classification_forward.1} parent=0 // pred_fallthru
    _
  // Predicated region
  $region38: #{sequence_classification_forward.1} parent=0 // pred_check
    _
  $region39: #{sequence_classification_forward.1} parent=0 // pred_check_branch
    %36 = sbr.rel (0) target = $region41
  $region40: #{sequence_classification_forward.1} parent=0 // pred_region
    _
  $region41: #{sequence_classification_forward.1} parent=0 // pred_fallthru
    _
  // Predicated region
  $region42: #{sequence_classification_forward.1} parent=0 // pred_check
    _
  $region43: #{sequence_classification_forward.1} parent=0 // pred_check_branch
    %38 = sbr.rel (0) target = $region45
  $region44: #{sequence_classification_forward.1} parent=0 // pred_region
    _
  $region45: #{sequence_classification_forward.1} parent=0 // pred_fallthru
    _
  // Predicated region
  $region46: #{sequence_classification_forward.1} parent=0 // pred_check
    _
  $region47: #{sequence_classification_forward.1} parent=0 // pred_check_branch
    %40 = sbr.rel (0) target = $region49
  $region48: #{sequence_classification_forward.1} parent=0 // pred_region
    _
  $region49: #{sequence_classification_forward.1} parent=0 // pred_fallthru
    _
  %v41 = vld [vmem:[%s4] sm:$0xff]
  %v42 = vld [vmem:[%s4 + $0x8] sm:$0xff]
  %v43 = vld [vmem:[%s4 + $0x10] sm:$0xff]
  %v44 = vld [vmem:[%s4 + $0x18] sm:$0xff]
  %v45 = vld [vmem:[%s4 + $0x20] sm:$0xff]
  %v46 = vld [vmem:[%s4 + $0x28] sm:$0xff]
  %v47 = vld [vmem:[%s4 + $0x30] sm:$0xff]
  %v48 = vld [vmem:[%s4 + $0x38] sm:$0xff]
  %v49 = vld [vmem:[%s4 + $0x40] sm:$0xff]
  %v50 = vld [vmem:[%s4 + $0x48] sm:$0xff]
  %v51 = vld [vmem:[%s4 + $0x50] sm:$0xff]
  %v52 = vld [vmem:[%s4 + $0x58] sm:$0xff]
  %v53 = vld [vmem:[%s4 + $0x60] sm:$0xff]
  %v54 = vld [vmem:[%s4 + $0x68] sm:$0xff]
  %v55 = vld [vmem:[%s4 + $0x70] sm:$0xff]
  %v56 = vld [vmem:[%s4 + $0x78] sm:$0xff]
  %v57 = vld [vmem:[%s0] sm:$0xff]
  %v58 = vld [vmem:[%s0 + $0x8] sm:$0xff]
  %v59 = vld [vmem:[%s0 + $0x10] sm:$0xff]
  %v60 = vld [vmem:[%s0 + $0x18] sm:$0xff]
  %v61 = vld [vmem:[%s0 + $0x20] sm:$0xff]
  %v62 = vld [vmem:[%s0 + $0x28] sm:$0xff]
  %v63 = vld [vmem:[%s0 + $0x30] sm:$0xff]
  %v64 = vld [vmem:[%s0 + $0x38] sm:$0xff]
  %v65 = vld [vmem:[%s2] sm:$0xff]
  %v66 = vld [vmem:[%s2 + $0x8] sm:$0xff]
  %v67 = vld [vmem:[%s2 + $0x10] sm:$0xff]
  %v68 = vld [vmem:[%s2 + $0x18] sm:$0xff]
  %v69 = vld [vmem:[%s3] sm:$0x1]
  %v71 = vlaneseq
  %v72 = vshrl.u32 %v71, 7
  %v73 = vsub.s32 0, %v72
  %v74 = vrot.slane %v69, %v73
  %vm76 = vcmask 261120
  %v78 = vsel %vm76, %v57, 0
  %v81 = vsel %vm76, %v58, 0
  %v84 = vsel %vm76, %v59, 0
  %v87 = vsel %vm76, %v60, 0
  %v90 = vsel %vm76, %v61, 0
  %v93 = vsel %vm76, %v62, 0
  %v96 = vsel %vm76, %v63, 0
  %v99 = vsel %vm76, %v64, 0
  %101 = vmatprep.subr.mxu0 0.0
  %102 = vmatpush1.msra.mxu0 %v65
  %103 = vmatprep.subr.mxu0 0.0
  %104 = vmatpush1.msra.mxu0 %v66
  %105 = vmatprep.subr.mxu0 0.0
  %106 = vmatpush1.msra.mxu0 %v67
  %107 = vmatprep.subr.mxu0 0.0
  %108 = vmatpush1.msra.mxu0 %v68
  %109 = vmatprep.subr.mxu0 0.0
  %110 = vmatpush1.msra.mxu0 0.0
  %111 = vmatprep.subr.mxu0 0.0
  %112 = vmatpush1.msra.mxu0 0.0
  %113 = vmatprep.subr.mxu0 0.0
  %114 = vmatpush1.msra.mxu0 0.0
  %115 = vmatprep.subr.mxu0 0.0
  %116 = vmatpush1.msra.mxu0 0.0
  %117 = vmatprep.subr.mxu0 0.0
  %118 = vmatpush1.msra.mxu0 0.0
  %119 = vmatprep.subr.mxu0 0.0
  %120 = vmatpush1.msra.mxu0 0.0
  %121 = vmatprep.subr.mxu0 0.0
  %122 = vmatpush1.msra.mxu0 0.0
  %123 = vmatprep.subr.mxu0 0.0
  %124 = vmatpush1.msra.mxu0 0.0
  %125 = vmatprep.subr.mxu0 0.0
  %126 = vmatpush1.msra.mxu0 0.0
  %127 = vmatprep.subr.mxu0 0.0
  %128 = vmatpush1.msra.mxu0 0.0
  %129 = vmatprep.subr.mxu0 0.0
  %130 = vmatpush1.msra.mxu0 0.0
  %131 = vmatprep.subr.mxu0 0.0
  %132 = vmatpush1.msra.mxu0 0.0
  %133 = vmatprep.subr.mxu0 0.0
  %134 = vmatpush1.msra.mxu0 0.0
  %135 = vmatprep.subr.mxu0 0.0
  %136 = vmatpush1.msra.mxu0 0.0
  %137 = vmatprep.subr.mxu0 0.0
  %138 = vmatpush1.msra.mxu0 0.0
  %139 = vmatprep.subr.mxu0 0.0
  %140 = vmatpush1.msra.mxu0 0.0
  %141 = vmatprep.subr.mxu0 0.0
  %142 = vmatpush1.msra.mxu0 0.0
  %143 = vmatprep.subr.mxu0 0.0
  %144 = vmatpush1.msra.mxu0 0.0
  %145 = vmatprep.subr.mxu0 0.0
  %146 = vmatpush1.msra.mxu0 0.0
  %147 = vmatprep.subr.mxu0 0.0
  %148 = vmatpush1.msra.mxu0 0.0
  %149 = vmatprep.subr.mxu0 0.0
  %150 = vmatpush1.msra.mxu0 0.0
  %151 = vmatprep.subr.mxu0 0.0
  %152 = vmatpush1.msra.mxu0 0.0
  %153 = vmatprep.subr.mxu0 0.0
  %154 = vmatpush1.msra.mxu0 0.0
  %155 = vmatprep.subr.mxu0 0.0
  %156 = vmatpush1.msra.mxu0 0.0
  %157 = vmatprep.subr.mxu0 0.0
  %158 = vmatpush1.msra.mxu0 0.0
  %159 = vmatprep.subr.mxu0 0.0
  %160 = vmatpush1.msra.mxu0 0.0
  %161 = vmatprep.subr.mxu0 0.0
  %162 = vmatpush1.msra.mxu0 0.0
  %163 = vmatprep.subr.mxu0 0.0
  %164 = vmatpush1.msra.mxu0 0.0
  %165 = vmatprep.mubr.f32.mxu0 0.0
  %166 = vmatmul.mubr.f32.gmra.mrb[0].mxu0 %v78
  %v167 = vpop.f32.mrb[0].mxu0
  %v168 = vadd.f32 %v74, %v167
  %v169 = vpop.f32.mrb[0].mxu0
  %170 = vmatprep.mubr.f32.mxu0 0.0
  %171 = vmatmul.mubr.f32.gmra.mrb[0].mxu0 %v81
  %v172 = vpop.f32.mrb[0].mxu0
  %v173 = vadd.f32 %v74, %v172
  %v174 = vpop.f32.mrb[0].mxu0
  %175 = vmatprep.mubr.f32.mxu0 0.0
  %176 = vmatmul.mubr.f32.gmra.mrb[0].mxu0 %v84
  %v177 = vpop.f32.mrb[0].mxu0
  %v178 = vadd.f32 %v74, %v177
  %v179 = vpop.f32.mrb[0].mxu0
  %180 = vmatprep.mubr.f32.mxu0 0.0
  %181 = vmatmul.mubr.f32.gmra.mrb[0].mxu0 %v87
  %v182 = vpop.f32.mrb[0].mxu0
  %v183 = vadd.f32 %v74, %v182
  %v184 = vpop.f32.mrb[0].mxu0
  %185 = vmatprep.mubr.f32.mxu0 0.0
  %186 = vmatmul.mubr.f32.gmra.mrb[0].mxu0 %v90
  %v187 = vpop.f32.mrb[0].mxu0
  %v188 = vadd.f32 %v74, %v187
  %v189 = vpop.f32.mrb[0].mxu0
  %190 = vmatprep.mubr.f32.mxu0 0.0
  %191 = vmatmul.mubr.f32.gmra.mrb[0].mxu0 %v93
  %v192 = vpop.f32.mrb[0].mxu0
  %v193 = vadd.f32 %v74, %v192
  %v194 = vpop.f32.mrb[0].mxu0
  %195 = vmatprep.mubr.f32.mxu0 0.0
  %196 = vmatmul.mubr.f32.gmra.mrb[0].mxu0 %v96
  %v197 = vpop.f32.mrb[0].mxu0
  %v198 = vadd.f32 %v74, %v197
  %v199 = vpop.f32.mrb[0].mxu0
  %200 = vmatprep.mubr.f32.mxu0 0.0
  %201 = vmatmul.mubr.f32.gmra.mrb[0].mxu0 %v99
  %v202 = vpop.f32.mrb[0].mxu0
  %v203 = vadd.f32 %v74, %v202
  %v204 = vpop.f32.mrb[0].mxu0
  %205 = vdwg.mxu0
  %v206 = vld [vmem:[%s5] sm:$0x1]
  %v208 = vlaneseq
  %v209 = vshrl.u32 %v208, 7
  %v210 = vsub.s32 0, %v209
  %v211 = vrot.slane %v206, %v210
  %v213 = vadd.f32 %v168, 0.0
  %v214 = vxor.u32 %v213, 2147483648
  %v215 = vmul.f32 %v214, 1.442695
  %v216 = vpow.pop %v215
  %v217 = vadd.f32 %v216, 1.0
  %v218 = vrcp.pop %v217
  %v219 = vmul.f32 1.0, %v218
  %v220 = vmul.f32 %v219, 2.0
  %v221 = vsub.f32 %v220, 1.0
  %v222 = vmul.f32 %v219, 0.0
  %224 = vrot.lane.b32.xlu0 %v221, 64
  %v225 = vpop.permute.xlu0 %224
  %v227 = vmul.f32 %v219, %v225
  %229 = vrot.lane.b32.xlu0 %v227, 32
  %v230 = vpop.permute.xlu0 %229
  %v232 = vadd.f32 %v222, %v230
  %v233 = vmul.f32 %v232, 2.0
  %v234 = vxor.u32 %v233, 2147483648
  %v235 = vmul.f32 %v234, 1.442695
  %v236 = vpow.pop %v235
  %v237 = vadd.f32 %v236, 1.0
  %v238 = vrcp.pop %v237
  %v239 = vmul.f32 1.0, %v238
  %v240 = vmul.f32 %v239, 2.0
  %v241 = vsub.f32 %v240, 1.0
  %243 = vrot.lane.b32.xlu0 %v241, 64
  %v244 = vpop.permute.xlu0 %243
  %v246 = vmul.f32 %v219, %v244
  %248 = vrot.lane.b32.xlu0 %v246, 32
  %v249 = vpop.permute.xlu0 %248
  %v251 = vsel %vm76, %v249, 0.0
  %vm252 = vcmask 523264
  %v254 = vsel %vm252, %v251, 0
  %256 = vmatprep.subr.mxu0 %v42
  %257 = vmatpush1.msra.mxu0 %v41
  %258 = vmatprep.subr.mxu0 %v44
  %259 = vmatpush1.msra.mxu0 %v43
  %260 = vmatprep.subr.mxu0 %v46
  %261 = vmatpush1.msra.mxu0 %v45
  %262 = vmatprep.subr.mxu0 %v48
  %263 = vmatpush1.msra.mxu0 %v47
  %264 = vmatprep.subr.mxu0 %v50
  %265 = vmatpush1.msra.mxu0 %v49
  %266 = vmatprep.subr.mxu0 %v52
  %267 = vmatpush1.msra.mxu0 %v51
  %268 = vmatprep.subr.mxu0 %v54
  %269 = vmatpush1.msra.mxu0 %v53
  %270 = vmatprep.subr.mxu0 %v56
  %271 = vmatpush1.msra.mxu0 %v55
  %272 = vmatprep.subr.mxu0 0.0
  %273 = vmatpush1.msra.mxu0 0.0
  %274 = vmatprep.subr.mxu0 0.0
  %275 = vmatpush1.msra.mxu0 0.0
  %276 = vmatprep.subr.mxu0 0.0
  %277 = vmatpush1.msra.mxu0 0.0
  %278 = vmatprep.subr.mxu0 0.0
  %279 = vmatpush1.msra.mxu0 0.0
  %280 = vmatprep.subr.mxu0 0.0
  %281 = vmatpush1.msra.mxu0 0.0
  %282 = vmatprep.subr.mxu0 0.0
  %283 = vmatpush1.msra.mxu0 0.0
  %284 = vmatprep.subr.mxu0 0.0
  %285 = vmatpush1.msra.mxu0 0.0
  %286 = vmatprep.subr.mxu0 0.0
  %287 = vmatpush1.msra.mxu0 0.0
  %288 = vmatprep.subr.mxu0 0.0
  %289 = vmatpush1.msra.mxu0 0.0
  %290 = vmatprep.subr.mxu0 0.0
  %291 = vmatpush1.msra.mxu0 0.0
  %292 = vmatprep.subr.mxu0 0.0
  %293 = vmatpush1.msra.mxu0 0.0
  %294 = vmatprep.subr.mxu0 0.0
  %295 = vmatpush1.msra.mxu0 0.0
  %296 = vmatprep.subr.mxu0 0.0
  %297 = vmatpush1.msra.mxu0 0.0
  %298 = vmatprep.subr.mxu0 0.0
  %299 = vmatpush1.msra.mxu0 0.0
  %300 = vmatprep.subr.mxu0 0.0
  %301 = vmatpush1.msra.mxu0 0.0
  %302 = vmatprep.subr.mxu0 0.0
  %303 = vmatpush1.msra.mxu0 0.0
  %304 = vmatprep.subr.mxu0 0.0
  %305 = vmatpush1.msra.mxu0 0.0
  %306 = vmatprep.subr.mxu0 0.0
  %307 = vmatpush1.msra.mxu0 0.0
  %308 = vmatprep.subr.mxu0 0.0
  %309 = vmatpush1.msra.mxu0 0.0
  %310 = vmatprep.subr.mxu0 0.0
  %311 = vmatpush1.msra.mxu0 0.0
  %312 = vmatprep.subr.mxu0 0.0
  %313 = vmatpush1.msra.mxu0 0.0
  %314 = vmatprep.subr.mxu0 0.0
  %315 = vmatpush1.msra.mxu0 0.0
  %316 = vmatprep.subr.mxu0 0.0
  %317 = vmatpush1.msra.mxu0 0.0
  %318 = vmatprep.subr.mxu0 0.0
  %319 = vmatpush1.msra.mxu0 0.0
  %320 = vmatprep.mubr.f32.mxu0 0.0
  %321 = vmatmul.mubr.f32.gmra.mrb[0].mxu0 %v254
  %v322 = vpop.f32.mrb[0].mxu0
  %v323 = vadd.f32 0.0, %v322
  %v324 = vpop.f32.mrb[0].mxu0
  %v325 = vadd.f32 0.0, %v324
  %326 = vdwg.mxu0
  %v327 = vadd.f32 %v323, %v211
  %v328 = vxor.u32 %v327, 2147483648
  %v329 = vmul.f32 %v328, 1.442695
  %v330 = vpow.pop %v329
  %v331 = vadd.f32 %v330, 1.0
  %v332 = vrcp.pop %v331
  %v333 = vmul.f32 1.0, %v332
  %v334 = vmul.f32 %v333, 2.0
  %v335 = vsub.f32 %v334, 1.0
  %v336 = vmul.f32 %v333, 0.0
  %338 = vrot.lane.b32.xlu0 %v335, 64
  %v339 = vpop.permute.xlu0 %338
  %v341 = vmul.f32 %v333, %v339
  %343 = vrot.lane.b32.xlu0 %v341, 32
  %v344 = vpop.permute.xlu0 %343
  %v346 = vadd.f32 %v336, %v344
  %v347 = vmul.f32 %v346, 2.0
  %v348 = vxor.u32 %v347, 2147483648
  %v349 = vmul.f32 %v348, 1.442695
  %v350 = vpow.pop %v349
  %v351 = vadd.f32 %v350, 1.0
  %v352 = vrcp.pop %v351
  %v353 = vmul.f32 1.0, %v352
  %v354 = vmul.f32 %v353, 2.0
  %v355 = vsub.f32 %v354, 1.0
  %357 = vrot.lane.b32.xlu0 %v355, 64
  %v358 = vpop.permute.xlu0 %357
  %v360 = vmul.f32 %v333, %v358
  %v361 = vadd.f32 %v173, %v325
  %v362 = vxor.u32 %v361, 2147483648
  %v363 = vmul.f32 %v362, 1.442695
  %v364 = vpow.pop %v363
  %v365 = vadd.f32 %v364, 1.0
  %v366 = vrcp.pop %v365
  %v367 = vmul.f32 1.0, %v366
  %v368 = vmul.f32 %v367, 2.0
  %v369 = vsub.f32 %v368, 1.0
  %v370 = vmul.f32 %v367, %v232
  %372 = vrot.lane.b32.xlu0 %v369, 64
  %v373 = vpop.permute.xlu0 %372
  %v375 = vmul.f32 %v367, %v373
  %377 = vrot.lane.b32.xlu0 %v375, 32
  %v378 = vpop.permute.xlu0 %377
  %v380 = vadd.f32 %v370, %v378
  %v381 = vmul.f32 %v380, 2.0
  %v382 = vxor.u32 %v381, 2147483648
  %v383 = vmul.f32 %v382, 1.442695
  %v384 = vpow.pop %v383
  %v385 = vadd.f32 %v384, 1.0
  %v386 = vrcp.pop %v385
  %v387 = vmul.f32 1.0, %v386
  %v388 = vmul.f32 %v387, 2.0
  %v389 = vsub.f32 %v388, 1.0
  %391 = vrot.lane.b32.xlu0 %v389, 64
  %v392 = vpop.permute.xlu0 %391
  %v394 = vmul.f32 %v367, %v392
  %396 = vrot.lane.b32.xlu0 %v394, 32
  %v397 = vpop.permute.xlu0 %396
  %400 = vrot.lane.b32.xlu0 %v360, 64
  %v401 = vpop.permute.xlu0 %400
  %v403 = vsel %vm76, %v397, %v401
  %v405 = vsel %vm252, %v403, 0
  %407 = vmatprep.subr.mxu0 %v42
  %408 = vmatpush1.msra.mxu0 %v41
  %409 = vmatprep.subr.mxu0 %v44
  %410 = vmatpush1.msra.mxu0 %v43
  %411 = vmatprep.subr.mxu0 %v46
  %412 = vmatpush1.msra.mxu0 %v45
  %413 = vmatprep.subr.mxu0 %v48
  %414 = vmatpush1.msra.mxu0 %v47
  %415 = vmatprep.subr.mxu0 %v50
  %416 = vmatpush1.msra.mxu0 %v49
  %417 = vmatprep.subr.mxu0 %v52
  %418 = vmatpush1.msra.mxu0 %v51
  %419 = vmatprep.subr.mxu0 %v54
  %420 = vmatpush1.msra.mxu0 %v53
  %421 = vmatprep.subr.mxu0 %v56
  %422 = vmatpush1.msra.mxu0 %v55
  %423 = vmatprep.subr.mxu0 0.0
  %424 = vmatpush1.msra.mxu0 0.0
  %425 = vmatprep.subr.mxu0 0.0
  %426 = vmatpush1.msra.mxu0 0.0
  %427 = vmatprep.subr.mxu0 0.0
  %428 = vmatpush1.msra.mxu0 0.0
  %429 = vmatprep.subr.mxu0 0.0
  %430 = vmatpush1.msra.mxu0 0.0
  %431 = vmatprep.subr.mxu0 0.0
  %432 = vmatpush1.msra.mxu0 0.0
  %433 = vmatprep.subr.mxu0 0.0
  %434 = vmatpush1.msra.mxu0 0.0
  %435 = vmatprep.subr.mxu0 0.0
  %436 = vmatpush1.msra.mxu0 0.0
  %437 = vmatprep.subr.mxu0 0.0
  %438 = vmatpush1.msra.mxu0 0.0
  %439 = vmatprep.subr.mxu0 0.0
  %440 = vmatpush1.msra.mxu0 0.0
  %441 = vmatprep.subr.mxu0 0.0
  %442 = vmatpush1.msra.mxu0 0.0
  %443 = vmatprep.subr.mxu0 0.0
  %444 = vmatpush1.msra.mxu0 0.0
  %445 = vmatprep.subr.mxu0 0.0
  %446 = vmatpush1.msra.mxu0 0.0
  %447 = vmatprep.subr.mxu0 0.0
  %448 = vmatpush1.msra.mxu0 0.0
  %449 = vmatprep.subr.mxu0 0.0
  %450 = vmatpush1.msra.mxu0 0.0
  %451 = vmatprep.subr.mxu0 0.0
  %452 = vmatpush1.msra.mxu0 0.0
  %453 = vmatprep.subr.mxu0 0.0
  %454 = vmatpush1.msra.mxu0 0.0
  %455 = vmatprep.subr.mxu0 0.0
  %456 = vmatpush1.msra.mxu0 0.0
  %457 = vmatprep.subr.mxu0 0.0
  %458 = vmatpush1.msra.mxu0 0.0
  %459 = vmatprep.subr.mxu0 0.0
  %460 = vmatpush1.msra.mxu0 0.0
  %461 = vmatprep.subr.mxu0 0.0
  %462 = vmatpush1.msra.mxu0 0.0
  %463 = vmatprep.subr.mxu0 0.0
  %464 = vmatpush1.msra.mxu0 0.0
  %465 = vmatprep.subr.mxu0 0.0
  %466 = vmatpush1.msra.mxu0 0.0
  %467 = vmatprep.subr.mxu0 0.0
  %468 = vmatpush1.msra.mxu0 0.0
  %469 = vmatprep.subr.mxu0 0.0
  %470 = vmatpush1.msra.mxu0 0.0
  %471 = vmatprep.mubr.f32.mxu0 0.0
  %472 = vmatmul.mubr.f32.gmra.mrb[0].mxu0 %v405
  %v473 = vpop.f32.mrb[0].mxu0
  %v474 = vadd.f32 0.0, %v473
  %v475 = vpop.f32.mrb[0].mxu0
  %v476 = vadd.f32 0.0, %v475
  %477 = vdwg.mxu0
  %v478 = vadd.f32 %v474, %v211
  %v479 = vxor.u32 %v478, 2147483648
  %v480 = vmul.f32 %v479, 1.442695
  %v481 = vpow.pop %v480
  %v482 = vadd.f32 %v481, 1.0
  %v483 = vrcp.pop %v482
  %v484 = vmul.f32 1.0, %v483
  %v485 = vmul.f32 %v484, 2.0
  %v486 = vsub.f32 %v485, 1.0
  %v487 = vmul.f32 %v484, %v346
  %489 = vrot.lane.b32.xlu0 %v486, 64
  %v490 = vpop.permute.xlu0 %489
  %v492 = vmul.f32 %v484, %v490
  %494 = vrot.lane.b32.xlu0 %v492, 32
  %v495 = vpop.permute.xlu0 %494
  %v497 = vadd.f32 %v487, %v495
  %v498 = vmul.f32 %v497, 2.0
  %v499 = vxor.u32 %v498, 2147483648
  %v500 = vmul.f32 %v499, 1.442695
  %v501 = vpow.pop %v500
  %v502 = vadd.f32 %v501, 1.0
  %v503 = vrcp.pop %v502
  %v504 = vmul.f32 1.0, %v503
  %v505 = vmul.f32 %v504, 2.0
  %v506 = vsub.f32 %v505, 1.0
  %508 = vrot.lane.b32.xlu0 %v506, 64
  %v509 = vpop.permute.xlu0 %508
  %v511 = vmul.f32 %v484, %v509
  %v512 = vadd.f32 %v178, %v476
  %v513 = vxor.u32 %v512, 2147483648
  %v514 = vmul.f32 %v513, 1.442695
  %v515 = vpow.pop %v514
  %v516 = vadd.f32 %v515, 1.0
  %v517 = vrcp.pop %v516
  %v518 = vmul.f32 1.0, %v517
  %v519 = vmul.f32 %v518, 2.0
  %v520 = vsub.f32 %v519, 1.0
  %v521 = vmul.f32 %v518, %v380
  %523 = vrot.lane.b32.xlu0 %v520, 64
  %v524 = vpop.permute.xlu0 %523
  %v526 = vmul.f32 %v518, %v524
  %528 = vrot.lane.b32.xlu0 %v526, 32
  %v529 = vpop.permute.xlu0 %528
  %v531 = vadd.f32 %v521, %v529
  %v532 = vmul.f32 %v531, 2.0
  %v533 = vxor.u32 %v532, 2147483648
  %v534 = vmul.f32 %v533, 1.442695
  %v535 = vpow.pop %v534
  %v536 = vadd.f32 %v535, 1.0
  %v537 = vrcp.pop %v536
  %v538 = vmul.f32 1.0, %v537
  %v539 = vmul.f32 %v538, 2.0
  %v540 = vsub.f32 %v539, 1.0
  %542 = vrot.lane.b32.xlu0 %v540, 64
  %v543 = vpop.permute.xlu0 %542
  %v545 = vmul.f32 %v518, %v543
  %547 = vrot.lane.b32.xlu0 %v545, 32
  %v548 = vpop.permute.xlu0 %547
  %551 = vrot.lane.b32.xlu0 %v511, 64
  %v552 = vpop.permute.xlu0 %551
  %v554 = vsel %vm76, %v548, %v552
  %v556 = vsel %vm252, %v554, 0
  %558 = vmatprep.subr.mxu0 %v42
  %559 = vmatpush1.msra.mxu0 %v41
  %560 = vmatprep.subr.mxu0 %v44
  %561 = vmatpush1.msra.mxu0 %v43
  %562 = vmatprep.subr.mxu0 %v46
  %563 = vmatpush1.msra.mxu0 %v45
  %564 = vmatprep.subr.mxu0 %v48
  %565 = vmatpush1.msra.mxu0 %v47
  %566 = vmatprep.subr.mxu0 %v50
  %567 = vmatpush1.msra.mxu0 %v49
  %568 = vmatprep.subr.mxu0 %v52
  %569 = vmatpush1.msra.mxu0 %v51
  %570 = vmatprep.subr.mxu0 %v54
  %571 = vmatpush1.msra.mxu0 %v53
  %572 = vmatprep.subr.mxu0 %v56
  %573 = vmatpush1.msra.mxu0 %v55
  %574 = vmatprep.subr.mxu0 0.0
  %575 = vmatpush1.msra.mxu0 0.0
  %576 = vmatprep.subr.mxu0 0.0
  %577 = vmatpush1.msra.mxu0 0.0
  %578 = vmatprep.subr.mxu0 0.0
  %579 = vmatpush1.msra.mxu0 0.0
  %580 = vmatprep.subr.mxu0 0.0
  %581 = vmatpush1.msra.mxu0 0.0
  %582 = vmatprep.subr.mxu0 0.0
  %583 = vmatpush1.msra.mxu0 0.0
  %584 = vmatprep.subr.mxu0 0.0
  %585 = vmatpush1.msra.mxu0 0.0
  %586 = vmatprep.subr.mxu0 0.0
  %587 = vmatpush1.msra.mxu0 0.0
  %588 = vmatprep.subr.mxu0 0.0
  %589 = vmatpush1.msra.mxu0 0.0
  %590 = vmatprep.subr.mxu0 0.0
  %591 = vmatpush1.msra.mxu0 0.0
  %592 = vmatprep.subr.mxu0 0.0
  %593 = vmatpush1.msra.mxu0 0.0
  %594 = vmatprep.subr.mxu0 0.0
  %595 = vmatpush1.msra.mxu0 0.0
  %596 = vmatprep.subr.mxu0 0.0
  %597 = vmatpush1.msra.mxu0 0.0
  %598 = vmatprep.subr.mxu0 0.0
  %599 = vmatpush1.msra.mxu0 0.0
  %600 = vmatprep.subr.mxu0 0.0
  %601 = vmatpush1.msra.mxu0 0.0
  %602 = vmatprep.subr.mxu0 0.0
  %603 = vmatpush1.msra.mxu0 0.0
  %604 = vmatprep.subr.mxu0 0.0
  %605 = vmatpush1.msra.mxu0 0.0
  %606 = vmatprep.subr.mxu0 0.0
  %607 = vmatpush1.msra.mxu0 0.0
  %608 = vmatprep.subr.mxu0 0.0
  %609 = vmatpush1.msra.mxu0 0.0
  %610 = vmatprep.subr.mxu0 0.0
  %611 = vmatpush1.msra.mxu0 0.0
  %612 = vmatprep.subr.mxu0 0.0
  %613 = vmatpush1.msra.mxu0 0.0
  %614 = vmatprep.subr.mxu0 0.0
  %615 = vmatpush1.msra.mxu0 0.0
  %616 = vmatprep.subr.mxu0 0.0
  %617 = vmatpush1.msra.mxu0 0.0
  %618 = vmatprep.subr.mxu0 0.0
  %619 = vmatpush1.msra.mxu0 0.0
  %620 = vmatprep.subr.mxu0 0.0
  %621 = vmatpush1.msra.mxu0 0.0
  %622 = vmatprep.mubr.f32.mxu0 0.0
  %623 = vmatmul.mubr.f32.gmra.mrb[0].mxu0 %v556
  %v624 = vpop.f32.mrb[0].mxu0
  %v625 = vadd.f32 0.0, %v624
  %v626 = vpop.f32.mrb[0].mxu0
  %v627 = vadd.f32 0.0, %v626
  %628 = vdwg.mxu0
  %v629 = vadd.f32 %v625, %v211
  %v630 = vxor.u32 %v629, 2147483648
  %v631 = vmul.f32 %v630, 1.442695
  %v632 = vpow.pop %v631
  %v633 = vadd.f32 %v632, 1.0
  %v634 = vrcp.pop %v633
  %v635 = vmul.f32 1.0, %v634
  %v636 = vmul.f32 %v635, 2.0
  %v637 = vsub.f32 %v636, 1.0
  %v638 = vmul.f32 %v635, %v497
  %640 = vrot.lane.b32.xlu0 %v637, 64
  %v641 = vpop.permute.xlu0 %640
  %v643 = vmul.f32 %v635, %v641
  %645 = vrot.lane.b32.xlu0 %v643, 32
  %v646 = vpop.permute.xlu0 %645
  %v648 = vadd.f32 %v638, %v646
  %v649 = vmul.f32 %v648, 2.0
  %v650 = vxor.u32 %v649, 2147483648
  %v651 = vmul.f32 %v650, 1.442695
  %v652 = vpow.pop %v651
  %v653 = vadd.f32 %v652, 1.0
  %v654 = vrcp.pop %v653
  %v655 = vmul.f32 1.0, %v654
  %v656 = vmul.f32 %v655, 2.0
  %v657 = vsub.f32 %v656, 1.0
  %659 = vrot.lane.b32.xlu0 %v657, 64
  %v660 = vpop.permute.xlu0 %659
  %v662 = vmul.f32 %v635, %v660
  %v663 = vadd.f32 %v183, %v627
  %v664 = vxor.u32 %v663, 2147483648
  %v665 = vmul.f32 %v664, 1.442695
  %v666 = vpow.pop %v665
  %v667 = vadd.f32 %v666, 1.0
  %v668 = vrcp.pop %v667
  %v669 = vmul.f32 1.0, %v668
  %v670 = vmul.f32 %v669, 2.0
  %v671 = vsub.f32 %v670, 1.0
  %v672 = vmul.f32 %v669, %v531
  %674 = vrot.lane.b32.xlu0 %v671, 64
  %v675 = vpop.permute.xlu0 %674
  %v677 = vmul.f32 %v669, %v675
  %679 = vrot.lane.b32.xlu0 %v677, 32
  %v680 = vpop.permute.xlu0 %679
  %v682 = vadd.f32 %v672, %v680
  %v683 = vmul.f32 %v682, 2.0
  %v684 = vxor.u32 %v683, 2147483648
  %v685 = vmul.f32 %v684, 1.442695
  %v686 = vpow.pop %v685
  %v687 = vadd.f32 %v686, 1.0
  %v688 = vrcp.pop %v687
  %v689 = vmul.f32 1.0, %v688
  %v690 = vmul.f32 %v689, 2.0
  %v691 = vsub.f32 %v690, 1.0
  %693 = vrot.lane.b32.xlu0 %v691, 64
  %v694 = vpop.permute.xlu0 %693
  %v696 = vmul.f32 %v669, %v694
  %698 = vrot.lane.b32.xlu0 %v696, 32
  %v699 = vpop.permute.xlu0 %698
  %702 = vrot.lane.b32.xlu0 %v662, 64
  %v703 = vpop.permute.xlu0 %702
  %v705 = vsel %vm76, %v699, %v703
  %v707 = vsel %vm252, %v705, 0
  %709 = vmatprep.subr.mxu0 %v42
  %710 = vmatpush1.msra.mxu0 %v41
  %711 = vmatprep.subr.mxu0 %v44
  %712 = vmatpush1.msra.mxu0 %v43
  %713 = vmatprep.subr.mxu0 %v46
  %714 = vmatpush1.msra.mxu0 %v45
  %715 = vmatprep.subr.mxu0 %v48
  %716 = vmatpush1.msra.mxu0 %v47
  %717 = vmatprep.subr.mxu0 %v50
  %718 = vmatpush1.msra.mxu0 %v49
  %719 = vmatprep.subr.mxu0 %v52
  %720 = vmatpush1.msra.mxu0 %v51
  %721 = vmatprep.subr.mxu0 %v54
  %722 = vmatpush1.msra.mxu0 %v53
  %723 = vmatprep.subr.mxu0 %v56
  %724 = vmatpush1.msra.mxu0 %v55
  %725 = vmatprep.subr.mxu0 0.0
  %726 = vmatpush1.msra.mxu0 0.0
  %727 = vmatprep.subr.mxu0 0.0
  %728 = vmatpush1.msra.mxu0 0.0
  %729 = vmatprep.subr.mxu0 0.0
  %730 = vmatpush1.msra.mxu0 0.0
  %731 = vmatprep.subr.mxu0 0.0
  %732 = vmatpush1.msra.mxu0 0.0
  %733 = vmatprep.subr.mxu0 0.0
  %734 = vmatpush1.msra.mxu0 0.0
  %735 = vmatprep.subr.mxu0 0.0
  %736 = vmatpush1.msra.mxu0 0.0
  %737 = vmatprep.subr.mxu0 0.0
  %738 = vmatpush1.msra.mxu0 0.0
  %739 = vmatprep.subr.mxu0 0.0
  %740 = vmatpush1.msra.mxu0 0.0
  %741 = vmatprep.subr.mxu0 0.0
  %742 = vmatpush1.msra.mxu0 0.0
  %743 = vmatprep.subr.mxu0 0.0
  %744 = vmatpush1.msra.mxu0 0.0
  %745 = vmatprep.subr.mxu0 0.0
  %746 = vmatpush1.msra.mxu0 0.0
  %747 = vmatprep.subr.mxu0 0.0
  %748 = vmatpush1.msra.mxu0 0.0
  %749 = vmatprep.subr.mxu0 0.0
  %750 = vmatpush1.msra.mxu0 0.0
  %751 = vmatprep.subr.mxu0 0.0
  %752 = vmatpush1.msra.mxu0 0.0
  %753 = vmatprep.subr.mxu0 0.0
  %754 = vmatpush1.msra.mxu0 0.0
  %755 = vmatprep.subr.mxu0 0.0
  %756 = vmatpush1.msra.mxu0 0.0
  %757 = vmatprep.subr.mxu0 0.0
  %758 = vmatpush1.msra.mxu0 0.0
  %759 = vmatprep.subr.mxu0 0.0
  %760 = vmatpush1.msra.mxu0 0.0
  %761 = vmatprep.subr.mxu0 0.0
  %762 = vmatpush1.msra.mxu0 0.0
  %763 = vmatprep.subr.mxu0 0.0
  %764 = vmatpush1.msra.mxu0 0.0
  %765 = vmatprep.subr.mxu0 0.0
  %766 = vmatpush1.msra.mxu0 0.0
  %767 = vmatprep.subr.mxu0 0.0
  %768 = vmatpush1.msra.mxu0 0.0
  %769 = vmatprep.subr.mxu0 0.0
  %770 = vmatpush1.msra.mxu0 0.0
  %771 = vmatprep.subr.mxu0 0.0
  %772 = vmatpush1.msra.mxu0 0.0
  %773 = vmatprep.mubr.f32.mxu0 0.0
  %774 = vmatmul.mubr.f32.gmra.mrb[0].mxu0 %v707
  %v775 = vpop.f32.mrb[0].mxu0
  %v776 = vadd.f32 0.0, %v775
  %v777 = vpop.f32.mrb[0].mxu0
  %v778 = vadd.f32 0.0, %v777
  %779 = vdwg.mxu0
  %v780 = vadd.f32 %v776, %v211
  %v781 = vxor.u32 %v780, 2147483648
  %v782 = vmul.f32 %v781, 1.442695
  %v783 = vpow.pop %v782
  %v784 = vadd.f32 %v783, 1.0
  %v785 = vrcp.pop %v784
  %v786 = vmul.f32 1.0, %v785
  %v787 = vmul.f32 %v786, 2.0
  %v788 = vsub.f32 %v787, 1.0
  %v789 = vmul.f32 %v786, %v648
  %791 = vrot.lane.b32.xlu0 %v788, 64
  %v792 = vpop.permute.xlu0 %791
  %v794 = vmul.f32 %v786, %v792
  %796 = vrot.lane.b32.xlu0 %v794, 32
  %v797 = vpop.permute.xlu0 %796
  %v799 = vadd.f32 %v789, %v797
  %v800 = vmul.f32 %v799, 2.0
  %v801 = vxor.u32 %v800, 2147483648
  %v802 = vmul.f32 %v801, 1.442695
  %v803 = vpow.pop %v802
  %v804 = vadd.f32 %v803, 1.0
  %v805 = vrcp.pop %v804
  %v806 = vmul.f32 1.0, %v805
  %v807 = vmul.f32 %v806, 2.0
  %v808 = vsub.f32 %v807, 1.0
  %810 = vrot.lane.b32.xlu0 %v808, 64
  %v811 = vpop.permute.xlu0 %810
  %v813 = vmul.f32 %v786, %v811
  %v814 = vadd.f32 %v188, %v778
  %v815 = vxor.u32 %v814, 2147483648
  %v816 = vmul.f32 %v815, 1.442695
  %v817 = vpow.pop %v816
  %v818 = vadd.f32 %v817, 1.0
  %v819 = vrcp.pop %v818
  %v820 = vmul.f32 1.0, %v819
  %v821 = vmul.f32 %v820, 2.0
  %v822 = vsub.f32 %v821, 1.0
  %v823 = vmul.f32 %v820, %v682
  %825 = vrot.lane.b32.xlu0 %v822, 64
  %v826 = vpop.permute.xlu0 %825
  %v828 = vmul.f32 %v820, %v826
  %830 = vrot.lane.b32.xlu0 %v828, 32
  %v831 = vpop.permute.xlu0 %830
  %v833 = vadd.f32 %v823, %v831
  %v834 = vmul.f32 %v833, 2.0
  %v835 = vxor.u32 %v834, 2147483648
  %v836 = vmul.f32 %v835, 1.442695
  %v837 = vpow.pop %v836
  %v838 = vadd.f32 %v837, 1.0
  %v839 = vrcp.pop %v838
  %v840 = vmul.f32 1.0, %v839
  %v841 = vmul.f32 %v840, 2.0
  %v842 = vsub.f32 %v841, 1.0
  %844 = vrot.lane.b32.xlu0 %v842, 64
  %v845 = vpop.permute.xlu0 %844
  %v847 = vmul.f32 %v820, %v845
  %849 = vrot.lane.b32.xlu0 %v847, 32
  %v850 = vpop.permute.xlu0 %849
  %853 = vrot.lane.b32.xlu0 %v813, 64
  %v854 = vpop.permute.xlu0 %853
  %v856 = vsel %vm76, %v850, %v854
  %v858 = vsel %vm252, %v856, 0
  %860 = vmatprep.subr.mxu0 %v42
  %861 = vmatpush1.msra.mxu0 %v41
  %862 = vmatprep.subr.mxu0 %v44
  %863 = vmatpush1.msra.mxu0 %v43
  %864 = vmatprep.subr.mxu0 %v46
  %865 = vmatpush1.msra.mxu0 %v45
  %866 = vmatprep.subr.mxu0 %v48
  %867 = vmatpush1.msra.mxu0 %v47
  %868 = vmatprep.subr.mxu0 %v50
  %869 = vmatpush1.msra.mxu0 %v49
  %870 = vmatprep.subr.mxu0 %v52
  %871 = vmatpush1.msra.mxu0 %v51
  %872 = vmatprep.subr.mxu0 %v54
  %873 = vmatpush1.msra.mxu0 %v53
  %874 = vmatprep.subr.mxu0 %v56
  %875 = vmatpush1.msra.mxu0 %v55
  %876 = vmatprep.subr.mxu0 0.0
  %877 = vmatpush1.msra.mxu0 0.0
  %878 = vmatprep.subr.mxu0 0.0
  %879 = vmatpush1.msra.mxu0 0.0
  %880 = vmatprep.subr.mxu0 0.0
  %881 = vmatpush1.msra.mxu0 0.0
  %882 = vmatprep.subr.mxu0 0.0
  %883 = vmatpush1.msra.mxu0 0.0
  %884 = vmatprep.subr.mxu0 0.0
  %885 = vmatpush1.msra.mxu0 0.0
  %886 = vmatprep.subr.mxu0 0.0
  %887 = vmatpush1.msra.mxu0 0.0
  %888 = vmatprep.subr.mxu0 0.0
  %889 = vmatpush1.msra.mxu0 0.0
  %890 = vmatprep.subr.mxu0 0.0
  %891 = vmatpush1.msra.mxu0 0.0
  %892 = vmatprep.subr.mxu0 0.0
  %893 = vmatpush1.msra.mxu0 0.0
  %894 = vmatprep.subr.mxu0 0.0
  %895 = vmatpush1.msra.mxu0 0.0
  %896 = vmatprep.subr.mxu0 0.0
  %897 = vmatpush1.msra.mxu0 0.0
  %898 = vmatprep.subr.mxu0 0.0
  %899 = vmatpush1.msra.mxu0 0.0
  %900 = vmatprep.subr.mxu0 0.0
  %901 = vmatpush1.msra.mxu0 0.0
  %902 = vmatprep.subr.mxu0 0.0
  %903 = vmatpush1.msra.mxu0 0.0
  %904 = vmatprep.subr.mxu0 0.0
  %905 = vmatpush1.msra.mxu0 0.0
  %906 = vmatprep.subr.mxu0 0.0
  %907 = vmatpush1.msra.mxu0 0.0
  %908 = vmatprep.subr.mxu0 0.0
  %909 = vmatpush1.msra.mxu0 0.0
  %910 = vmatprep.subr.mxu0 0.0
  %911 = vmatpush1.msra.mxu0 0.0
  %912 = vmatprep.subr.mxu0 0.0
  %913 = vmatpush1.msra.mxu0 0.0
  %914 = vmatprep.subr.mxu0 0.0
  %915 = vmatpush1.msra.mxu0 0.0
  %916 = vmatprep.subr.mxu0 0.0
  %917 = vmatpush1.msra.mxu0 0.0
  %918 = vmatprep.subr.mxu0 0.0
  %919 = vmatpush1.msra.mxu0 0.0
  %920 = vmatprep.subr.mxu0 0.0
  %921 = vmatpush1.msra.mxu0 0.0
  %922 = vmatprep.subr.mxu0 0.0
  %923 = vmatpush1.msra.mxu0 0.0
  %924 = vmatprep.mubr.f32.mxu0 0.0
  %925 = vmatmul.mubr.f32.gmra.mrb[0].mxu0 %v858
  %v926 = vpop.f32.mrb[0].mxu0
  %v927 = vadd.f32 0.0, %v926
  %v928 = vpop.f32.mrb[0].mxu0
  %v929 = vadd.f32 0.0, %v928
  %930 = vdwg.mxu0
  %v931 = vadd.f32 %v927, %v211
  %v932 = vxor.u32 %v931, 2147483648
  %v933 = vmul.f32 %v932, 1.442695
  %v934 = vpow.pop %v933
  %v935 = vadd.f32 %v934, 1.0
  %v936 = vrcp.pop %v935
  %v937 = vmul.f32 1.0, %v936
  %v938 = vmul.f32 %v937, 2.0
  %v939 = vsub.f32 %v938, 1.0
  %v940 = vmul.f32 %v937, %v799
  %942 = vrot.lane.b32.xlu0 %v939, 64
  %v943 = vpop.permute.xlu0 %942
  %v945 = vmul.f32 %v937, %v943
  %947 = vrot.lane.b32.xlu0 %v945, 32
  %v948 = vpop.permute.xlu0 %947
  %v950 = vadd.f32 %v940, %v948
  %v951 = vmul.f32 %v950, 2.0
  %v952 = vxor.u32 %v951, 2147483648
  %v953 = vmul.f32 %v952, 1.442695
  %v954 = vpow.pop %v953
  %v955 = vadd.f32 %v954, 1.0
  %v956 = vrcp.pop %v955
  %v957 = vmul.f32 1.0, %v956
  %v958 = vmul.f32 %v957, 2.0
  %v959 = vsub.f32 %v958, 1.0
  %961 = vrot.lane.b32.xlu0 %v959, 64
  %v962 = vpop.permute.xlu0 %961
  %v964 = vmul.f32 %v937, %v962
  %v965 = vadd.f32 %v193, %v929
  %v966 = vxor.u32 %v965, 2147483648
  %v967 = vmul.f32 %v966, 1.442695
  %v968 = vpow.pop %v967
  %v969 = vadd.f32 %v968, 1.0
  %v970 = vrcp.pop %v969
  %v971 = vmul.f32 1.0, %v970
  %v972 = vmul.f32 %v971, 2.0
  %v973 = vsub.f32 %v972, 1.0
  %v974 = vmul.f32 %v971, %v833
  %976 = vrot.lane.b32.xlu0 %v973, 64
  %v977 = vpop.permute.xlu0 %976
  %v979 = vmul.f32 %v971, %v977
  %981 = vrot.lane.b32.xlu0 %v979, 32
  %v982 = vpop.permute.xlu0 %981
  %v984 = vadd.f32 %v974, %v982
  %v985 = vmul.f32 %v984, 2.0
  %v986 = vxor.u32 %v985, 2147483648
  %v987 = vmul.f32 %v986, 1.442695
  %v988 = vpow.pop %v987
  %v989 = vadd.f32 %v988, 1.0
  %v990 = vrcp.pop %v989
  %v991 = vmul.f32 1.0, %v990
  %v992 = vmul.f32 %v991, 2.0
  %v993 = vsub.f32 %v992, 1.0
  %995 = vrot.lane.b32.xlu0 %v993, 64
  %v996 = vpop.permute.xlu0 %995
  %v998 = vmul.f32 %v971, %v996
  %1000 = vrot.lane.b32.xlu0 %v998, 32
  %v1001 = vpop.permute.xlu0 %1000
  %1004 = vrot.lane.b32.xlu0 %v964, 64
  %v1005 = vpop.permute.xlu0 %1004
  %v1007 = vsel %vm76, %v1001, %v1005
  %v1009 = vsel %vm252, %v1007, 0
  %1011 = vmatprep.subr.mxu0 %v42
  %1012 = vmatpush1.msra.mxu0 %v41
  %1013 = vmatprep.subr.mxu0 %v44
  %1014 = vmatpush1.msra.mxu0 %v43
  %1015 = vmatprep.subr.mxu0 %v46
  %1016 = vmatpush1.msra.mxu0 %v45
  %1017 = vmatprep.subr.mxu0 %v48
  %1018 = vmatpush1.msra.mxu0 %v47
  %1019 = vmatprep.subr.mxu0 %v50
  %1020 = vmatpush1.msra.mxu0 %v49
  %1021 = vmatprep.subr.mxu0 %v52
  %1022 = vmatpush1.msra.mxu0 %v51
  %1023 = vmatprep.subr.mxu0 %v54
  %1024 = vmatpush1.msra.mxu0 %v53
  %1025 = vmatprep.subr.mxu0 %v56
  %1026 = vmatpush1.msra.mxu0 %v55
  %1027 = vmatprep.subr.mxu0 0.0
  %1028 = vmatpush1.msra.mxu0 0.0
  %1029 = vmatprep.subr.mxu0 0.0
  %1030 = vmatpush1.msra.mxu0 0.0
  %1031 = vmatprep.subr.mxu0 0.0
  %1032 = vmatpush1.msra.mxu0 0.0
  %1033 = vmatprep.subr.mxu0 0.0
  %1034 = vmatpush1.msra.mxu0 0.0
  %1035 = vmatprep.subr.mxu0 0.0
  %1036 = vmatpush1.msra.mxu0 0.0
  %1037 = vmatprep.subr.mxu0 0.0
  %1038 = vmatpush1.msra.mxu0 0.0
  %1039 = vmatprep.subr.mxu0 0.0
  %1040 = vmatpush1.msra.mxu0 0.0
  %1041 = vmatprep.subr.mxu0 0.0
  %1042 = vmatpush1.msra.mxu0 0.0
  %1043 = vmatprep.subr.mxu0 0.0
  %1044 = vmatpush1.msra.mxu0 0.0
  %1045 = vmatprep.subr.mxu0 0.0
  %1046 = vmatpush1.msra.mxu0 0.0
  %1047 = vmatprep.subr.mxu0 0.0
  %1048 = vmatpush1.msra.mxu0 0.0
  %1049 = vmatprep.subr.mxu0 0.0
  %1050 = vmatpush1.msra.mxu0 0.0
  %1051 = vmatprep.subr.mxu0 0.0
  %1052 = vmatpush1.msra.mxu0 0.0
  %1053 = vmatprep.subr.mxu0 0.0
  %1054 = vmatpush1.msra.mxu0 0.0
  %1055 = vmatprep.subr.mxu0 0.0
  %1056 = vmatpush1.msra.mxu0 0.0
  %1057 = vmatprep.subr.mxu0 0.0
  %1058 = vmatpush1.msra.mxu0 0.0
  %1059 = vmatprep.subr.mxu0 0.0
  %1060 = vmatpush1.msra.mxu0 0.0
  %1061 = vmatprep.subr.mxu0 0.0
  %1062 = vmatpush1.msra.mxu0 0.0
  %1063 = vmatprep.subr.mxu0 0.0
  %1064 = vmatpush1.msra.mxu0 0.0
  %1065 = vmatprep.subr.mxu0 0.0
  %1066 = vmatpush1.msra.mxu0 0.0
  %1067 = vmatprep.subr.mxu0 0.0
  %1068 = vmatpush1.msra.mxu0 0.0
  %1069 = vmatprep.subr.mxu0 0.0
  %1070 = vmatpush1.msra.mxu0 0.0
  %1071 = vmatprep.subr.mxu0 0.0
  %1072 = vmatpush1.msra.mxu0 0.0
  %1073 = vmatprep.subr.mxu0 0.0
  %1074 = vmatpush1.msra.mxu0 0.0
  %1075 = vmatprep.mubr.f32.mxu0 0.0
  %1076 = vmatmul.mubr.f32.gmra.mrb[0].mxu0 %v1009
  %v1077 = vpop.f32.mrb[0].mxu0
  %v1078 = vadd.f32 0.0, %v1077
  %v1079 = vpop.f32.mrb[0].mxu0
  %v1080 = vadd.f32 0.0, %v1079
  %1081 = vdwg.mxu0
  %v1082 = vadd.f32 %v1078, %v211
  %v1083 = vxor.u32 %v1082, 2147483648
  %v1084 = vmul.f32 %v1083, 1.442695
  %v1085 = vpow.pop %v1084
  %v1086 = vadd.f32 %v1085, 1.0
  %v1087 = vrcp.pop %v1086
  %v1088 = vmul.f32 1.0, %v1087
  %v1089 = vmul.f32 %v1088, 2.0
  %v1090 = vsub.f32 %v1089, 1.0
  %v1091 = vmul.f32 %v1088, %v950
  %1093 = vrot.lane.b32.xlu0 %v1090, 64
  %v1094 = vpop.permute.xlu0 %1093
  %v1096 = vmul.f32 %v1088, %v1094
  %1098 = vrot.lane.b32.xlu0 %v1096, 32
  %v1099 = vpop.permute.xlu0 %1098
  %v1101 = vadd.f32 %v1091, %v1099
  %v1102 = vmul.f32 %v1101, 2.0
  %v1103 = vxor.u32 %v1102, 2147483648
  %v1104 = vmul.f32 %v1103, 1.442695
  %v1105 = vpow.pop %v1104
  %v1106 = vadd.f32 %v1105, 1.0
  %v1107 = vrcp.pop %v1106
  %v1108 = vmul.f32 1.0, %v1107
  %v1109 = vmul.f32 %v1108, 2.0
  %v1110 = vsub.f32 %v1109, 1.0
  %1112 = vrot.lane.b32.xlu0 %v1110, 64
  %v1113 = vpop.permute.xlu0 %1112
  %v1115 = vmul.f32 %v1088, %v1113
  %v1116 = vadd.f32 %v198, %v1080
  %v1117 = vxor.u32 %v1116, 2147483648
  %v1118 = vmul.f32 %v1117, 1.442695
  %v1119 = vpow.pop %v1118
  %v1120 = vadd.f32 %v1119, 1.0
  %v1121 = vrcp.pop %v1120
  %v1122 = vmul.f32 1.0, %v1121
  %v1123 = vmul.f32 %v1122, 2.0
  %v1124 = vsub.f32 %v1123, 1.0
  %v1125 = vmul.f32 %v1122, %v984
  %1127 = vrot.lane.b32.xlu0 %v1124, 64
  %v1128 = vpop.permute.xlu0 %1127
  %v1130 = vmul.f32 %v1122, %v1128
  %1132 = vrot.lane.b32.xlu0 %v1130, 32
  %v1133 = vpop.permute.xlu0 %1132
  %v1135 = vadd.f32 %v1125, %v1133
  %v1136 = vmul.f32 %v1135, 2.0
  %v1137 = vxor.u32 %v1136, 2147483648
  %v1138 = vmul.f32 %v1137, 1.442695
  %v1139 = vpow.pop %v1138
  %v1140 = vadd.f32 %v1139, 1.0
  %v1141 = vrcp.pop %v1140
  %v1142 = vmul.f32 1.0, %v1141
  %v1143 = vmul.f32 %v1142, 2.0
  %v1144 = vsub.f32 %v1143, 1.0
  %1146 = vrot.lane.b32.xlu0 %v1144, 64
  %v1147 = vpop.permute.xlu0 %1146
  %v1149 = vmul.f32 %v1122, %v1147
  %1151 = vrot.lane.b32.xlu0 %v1149, 32
  %v1152 = vpop.permute.xlu0 %1151
  %1155 = vrot.lane.b32.xlu0 %v1115, 64
  %v1156 = vpop.permute.xlu0 %1155
  %v1158 = vsel %vm76, %v1152, %v1156
  %v1160 = vsel %vm252, %v1158, 0
  %1162 = vmatprep.subr.mxu0 %v42
  %1163 = vmatpush1.msra.mxu0 %v41
  %1164 = vmatprep.subr.mxu0 %v44
  %1165 = vmatpush1.msra.mxu0 %v43
  %1166 = vmatprep.subr.mxu0 %v46
  %1167 = vmatpush1.msra.mxu0 %v45
  %1168 = vmatprep.subr.mxu0 %v48
  %1169 = vmatpush1.msra.mxu0 %v47
  %1170 = vmatprep.subr.mxu0 %v50
  %1171 = vmatpush1.msra.mxu0 %v49
  %1172 = vmatprep.subr.mxu0 %v52
  %1173 = vmatpush1.msra.mxu0 %v51
  %1174 = vmatprep.subr.mxu0 %v54
  %1175 = vmatpush1.msra.mxu0 %v53
  %1176 = vmatprep.subr.mxu0 %v56
  %1177 = vmatpush1.msra.mxu0 %v55
  %1178 = vmatprep.subr.mxu0 0.0
  %1179 = vmatpush1.msra.mxu0 0.0
  %1180 = vmatprep.subr.mxu0 0.0
  %1181 = vmatpush1.msra.mxu0 0.0
  %1182 = vmatprep.subr.mxu0 0.0
  %1183 = vmatpush1.msra.mxu0 0.0
  %1184 = vmatprep.subr.mxu0 0.0
  %1185 = vmatpush1.msra.mxu0 0.0
  %1186 = vmatprep.subr.mxu0 0.0
  %1187 = vmatpush1.msra.mxu0 0.0
  %1188 = vmatprep.subr.mxu0 0.0
  %1189 = vmatpush1.msra.mxu0 0.0
  %1190 = vmatprep.subr.mxu0 0.0
  %1191 = vmatpush1.msra.mxu0 0.0
  %1192 = vmatprep.subr.mxu0 0.0
  %1193 = vmatpush1.msra.mxu0 0.0
  %1194 = vmatprep.subr.mxu0 0.0
  %1195 = vmatpush1.msra.mxu0 0.0
  %1196 = vmatprep.subr.mxu0 0.0
  %1197 = vmatpush1.msra.mxu0 0.0
  %1198 = vmatprep.subr.mxu0 0.0
  %1199 = vmatpush1.msra.mxu0 0.0
  %1200 = vmatprep.subr.mxu0 0.0
  %1201 = vmatpush1.msra.mxu0 0.0
  %1202 = vmatprep.subr.mxu0 0.0
  %1203 = vmatpush1.msra.mxu0 0.0
  %1204 = vmatprep.subr.mxu0 0.0
  %1205 = vmatpush1.msra.mxu0 0.0
  %1206 = vmatprep.subr.mxu0 0.0
  %1207 = vmatpush1.msra.mxu0 0.0
  %1208 = vmatprep.subr.mxu0 0.0
  %1209 = vmatpush1.msra.mxu0 0.0
  %1210 = vmatprep.subr.mxu0 0.0
  %1211 = vmatpush1.msra.mxu0 0.0
  %1212 = vmatprep.subr.mxu0 0.0
  %1213 = vmatpush1.msra.mxu0 0.0
  %1214 = vmatprep.subr.mxu0 0.0
  %1215 = vmatpush1.msra.mxu0 0.0
  %1216 = vmatprep.subr.mxu0 0.0
  %1217 = vmatpush1.msra.mxu0 0.0
  %1218 = vmatprep.subr.mxu0 0.0
  %1219 = vmatpush1.msra.mxu0 0.0
  %1220 = vmatprep.subr.mxu0 0.0
  %1221 = vmatpush1.msra.mxu0 0.0
  %1222 = vmatprep.subr.mxu0 0.0
  %1223 = vmatpush1.msra.mxu0 0.0
  %1224 = vmatprep.subr.mxu0 0.0
  %1225 = vmatpush1.msra.mxu0 0.0
  %1226 = vmatprep.mubr.f32.mxu0 0.0
  %1227 = vmatmul.mubr.f32.gmra.mrb[0].mxu0 %v1160
  %v1228 = vpop.f32.mrb[0].mxu0
  %v1229 = vadd.f32 0.0, %v1228
  %v1230 = vpop.f32.mrb[0].mxu0
  %v1231 = vadd.f32 0.0, %v1230
  %1232 = vdwg.mxu0
  %v1233 = vadd.f32 %v1229, %v211
  %v1234 = vxor.u32 %v1233, 2147483648
  %v1235 = vmul.f32 %v1234, 1.442695
  %v1236 = vpow.pop %v1235
  %v1237 = vadd.f32 %v1236, 1.0
  %v1238 = vrcp.pop %v1237
  %v1239 = vmul.f32 1.0, %v1238
  %v1240 = vmul.f32 %v1239, 2.0
  %v1241 = vsub.f32 %v1240, 1.0
  %v1242 = vmul.f32 %v1239, %v1101
  %1244 = vrot.lane.b32.xlu0 %v1241, 64
  %v1245 = vpop.permute.xlu0 %1244
  %v1247 = vmul.f32 %v1239, %v1245
  %1249 = vrot.lane.b32.xlu0 %v1247, 32
  %v1250 = vpop.permute.xlu0 %1249
  %v1252 = vadd.f32 %v1242, %v1250
  %v1253 = vmul.f32 %v1252, 2.0
  %v1254 = vxor.u32 %v1253, 2147483648
  %v1255 = vmul.f32 %v1254, 1.442695
  %v1256 = vpow.pop %v1255
  %v1257 = vadd.f32 %v1256, 1.0
  %v1258 = vrcp.pop %v1257
  %v1259 = vmul.f32 1.0, %v1258
  %v1260 = vmul.f32 %v1259, 2.0
  %v1261 = vsub.f32 %v1260, 1.0
  %1263 = vrot.lane.b32.xlu0 %v1261, 64
  %v1264 = vpop.permute.xlu0 %1263
  %v1266 = vmul.f32 %v1239, %v1264
  %v1267 = vadd.f32 %v203, %v1231
  %v1268 = vxor.u32 %v1267, 2147483648
  %v1269 = vmul.f32 %v1268, 1.442695
  %v1270 = vpow.pop %v1269
  %v1271 = vadd.f32 %v1270, 1.0
  %v1272 = vrcp.pop %v1271
  %v1273 = vmul.f32 1.0, %v1272
  %v1274 = vmul.f32 %v1273, 2.0
  %v1275 = vsub.f32 %v1274, 1.0
  %v1276 = vmul.f32 %v1273, %v1135
  %1278 = vrot.lane.b32.xlu0 %v1275, 64
  %v1279 = vpop.permute.xlu0 %1278
  %v1281 = vmul.f32 %v1273, %v1279
  %1283 = vrot.lane.b32.xlu0 %v1281, 32
  %v1284 = vpop.permute.xlu0 %1283
  %v1286 = vadd.f32 %v1276, %v1284
  %v1287 = vmul.f32 %v1286, 2.0
  %v1288 = vxor.u32 %v1287, 2147483648
  %v1289 = vmul.f32 %v1288, 1.442695
  %v1290 = vpow.pop %v1289
  %v1291 = vadd.f32 %v1290, 1.0
  %v1292 = vrcp.pop %v1291
  %v1293 = vmul.f32 1.0, %v1292
  %v1294 = vmul.f32 %v1293, 2.0
  %v1295 = vsub.f32 %v1294, 1.0
  %1297 = vrot.lane.b32.xlu0 %v1295, 64
  %v1298 = vpop.permute.xlu0 %1297
  %v1300 = vmul.f32 %v1273, %v1298
  %1302 = vrot.lane.b32.xlu0 %v1300, 32
  %v1303 = vpop.permute.xlu0 %1302
  %1306 = vrot.lane.b32.xlu0 %v1266, 64
  %v1307 = vpop.permute.xlu0 %1306
  %v1309 = vsel %vm76, %v1303, %v1307
  %v1311 = vsel %vm252, %v1309, 0
  %1313 = vmatprep.subr.mxu0 %v42
  %1314 = vmatpush1.msra.mxu0 %v41
  %1315 = vmatprep.subr.mxu0 %v44
  %1316 = vmatpush1.msra.mxu0 %v43
  %1317 = vmatprep.subr.mxu0 %v46
  %1318 = vmatpush1.msra.mxu0 %v45
  %1319 = vmatprep.subr.mxu0 %v48
  %1320 = vmatpush1.msra.mxu0 %v47
  %1321 = vmatprep.subr.mxu0 %v50
  %1322 = vmatpush1.msra.mxu0 %v49
  %1323 = vmatprep.subr.mxu0 %v52
  %1324 = vmatpush1.msra.mxu0 %v51
  %1325 = vmatprep.subr.mxu0 %v54
  %1326 = vmatpush1.msra.mxu0 %v53
  %1327 = vmatprep.subr.mxu0 %v56
  %1328 = vmatpush1.msra.mxu0 %v55
  %1329 = vmatprep.subr.mxu0 0.0
  %1330 = vmatpush1.msra.mxu0 0.0
  %1331 = vmatprep.subr.mxu0 0.0
  %1332 = vmatpush1.msra.mxu0 0.0
  %1333 = vmatprep.subr.mxu0 0.0
  %1334 = vmatpush1.msra.mxu0 0.0
  %1335 = vmatprep.subr.mxu0 0.0
  %1336 = vmatpush1.msra.mxu0 0.0
  %1337 = vmatprep.subr.mxu0 0.0
  %1338 = vmatpush1.msra.mxu0 0.0
  %1339 = vmatprep.subr.mxu0 0.0
  %1340 = vmatpush1.msra.mxu0 0.0
  %1341 = vmatprep.subr.mxu0 0.0
  %1342 = vmatpush1.msra.mxu0 0.0
  %1343 = vmatprep.subr.mxu0 0.0
  %1344 = vmatpush1.msra.mxu0 0.0
  %1345 = vmatprep.subr.mxu0 0.0
  %1346 = vmatpush1.msra.mxu0 0.0
  %1347 = vmatprep.subr.mxu0 0.0
  %1348 = vmatpush1.msra.mxu0 0.0
  %1349 = vmatprep.subr.mxu0 0.0
  %1350 = vmatpush1.msra.mxu0 0.0
  %1351 = vmatprep.subr.mxu0 0.0
  %1352 = vmatpush1.msra.mxu0 0.0
  %1353 = vmatprep.subr.mxu0 0.0
  %1354 = vmatpush1.msra.mxu0 0.0
  %1355 = vmatprep.subr.mxu0 0.0
  %1356 = vmatpush1.msra.mxu0 0.0
  %1357 = vmatprep.subr.mxu0 0.0
  %1358 = vmatpush1.msra.mxu0 0.0
  %1359 = vmatprep.subr.mxu0 0.0
  %1360 = vmatpush1.msra.mxu0 0.0
  %1361 = vmatprep.subr.mxu0 0.0
  %1362 = vmatpush1.msra.mxu0 0.0
  %1363 = vmatprep.subr.mxu0 0.0
  %1364 = vmatpush1.msra.mxu0 0.0
  %1365 = vmatprep.subr.mxu0 0.0
  %1366 = vmatpush1.msra.mxu0 0.0
  %1367 = vmatprep.subr.mxu0 0.0
  %1368 = vmatpush1.msra.mxu0 0.0
  %1369 = vmatprep.subr.mxu0 0.0
  %1370 = vmatpush1.msra.mxu0 0.0
  %1371 = vmatprep.subr.mxu0 0.0
  %1372 = vmatpush1.msra.mxu0 0.0
  %1373 = vmatprep.subr.mxu0 0.0
  %1374 = vmatpush1.msra.mxu0 0.0
  %1375 = vmatprep.subr.mxu0 0.0
  %1376 = vmatpush1.msra.mxu0 0.0
  %1377 = vmatprep.mubr.f32.mxu0 0.0
  %1378 = vmatmul.mubr.f32.gmra.mrb[0].mxu0 %v1311
  %v1379 = vpop.f32.mrb[0].mxu0
  %v1380 = vadd.f32 0.0, %v1379
  %v1381 = vpop.f32.mrb[0].mxu0
  %1382 = vdwg.mxu0
  %v1383 = vadd.f32 %v1380, %v211
  %v1384 = vxor.u32 %v1383, 2147483648
  %v1385 = vmul.f32 %v1384, 1.442695
  %v1386 = vpow.pop %v1385
  %v1387 = vadd.f32 %v1386, 1.0
  %v1388 = vrcp.pop %v1387
  %v1389 = vmul.f32 1.0, %v1388
  %v1390 = vmul.f32 %v1389, 2.0
  %v1391 = vsub.f32 %v1390, 1.0
  %v1392 = vmul.f32 %v1389, %v1252
  %1394 = vrot.lane.b32.xlu0 %v1391, 64
  %v1395 = vpop.permute.xlu0 %1394
  %v1397 = vmul.f32 %v1389, %v1395
  %1399 = vrot.lane.b32.xlu0 %v1397, 32
  %v1400 = vpop.permute.xlu0 %1399
  %v1402 = vadd.f32 %v1392, %v1400
  %v1403 = vmul.f32 %v1402, 2.0
  %v1404 = vxor.u32 %v1403, 2147483648
  %v1405 = vmul.f32 %v1404, 1.442695
  %v1406 = vpow.pop %v1405
  %v1407 = vadd.f32 %v1406, 1.0
  %v1408 = vrcp.pop %v1407
  %v1409 = vmul.f32 1.0, %v1408
  %v1410 = vmul.f32 %v1409, 2.0
  %v1411 = vsub.f32 %v1410, 1.0
  %1413 = vrot.lane.b32.xlu0 %v1411, 64
  %v1414 = vpop.permute.xlu0 %1413
  %v1416 = vmul.f32 %v1389, %v1414
  %v1417 = vld [vmem:[%s1] sm:$0xff]
  %1419 = vrot.lane.b32.xlu0 %v1416, 32
  %v1420 = vpop.permute.xlu0 %1419
  %1423 = vrot.lane.b32.xlu0 %v1417, 32
  %v1424 = vpop.permute.xlu0 %1423
  %v1426 = vsel %vm76, %v1420, %v1424
  %v1427 = vld [vmem:[%s6] sm:$0xff]
  %v1428 = vld [vmem:[%s6 + $0x8] sm:$0xff]
  %v1429 = vld [vmem:[%s6 + $0x10] sm:$0xff]
  %v1430 = vld [vmem:[%s6 + $0x18] sm:$0xff]
  %v1431 = vld [vmem:[%s6 + $0x20] sm:$0xff]
  %v1432 = vld [vmem:[%s6 + $0x28] sm:$0xff]
  %v1433 = vld [vmem:[%s6 + $0x30] sm:$0xff]
  %v1434 = vld [vmem:[%s6 + $0x38] sm:$0xff]
  %v1435 = vld [vmem:[%s7] sm:$0x1]
  %v1437 = vlaneseq
  %v1438 = vshrl.u32 %v1437, 7
  %v1439 = vsub.s32 0, %v1438
  %v1440 = vrot.slane %v1435, %v1439
  %v1443 = vsel %vm252, %v1426, 0
  %1445 = vmatprep.subr.mxu0 0.0
  %1446 = vmatpush1.msra.mxu0 %v1427
  %1447 = vmatprep.subr.mxu0 0.0
  %1448 = vmatpush1.msra.mxu0 %v1428
  %1449 = vmatprep.subr.mxu0 0.0
  %1450 = vmatpush1.msra.mxu0 %v1429
  %1451 = vmatprep.subr.mxu0 0.0
  %1452 = vmatpush1.msra.mxu0 %v1430
  %1453 = vmatprep.subr.mxu0 0.0
  %1454 = vmatpush1.msra.mxu0 %v1431
  %1455 = vmatprep.subr.mxu0 0.0
  %1456 = vmatpush1.msra.mxu0 %v1432
  %1457 = vmatprep.subr.mxu0 0.0
  %1458 = vmatpush1.msra.mxu0 %v1433
  %1459 = vmatprep.subr.mxu0 0.0
  %1460 = vmatpush1.msra.mxu0 %v1434
  %1461 = vmatprep.subr.mxu0 0.0
  %1462 = vmatpush1.msra.mxu0 0.0
  %1463 = vmatprep.subr.mxu0 0.0
  %1464 = vmatpush1.msra.mxu0 0.0
  %1465 = vmatprep.subr.mxu0 0.0
  %1466 = vmatpush1.msra.mxu0 0.0
  %1467 = vmatprep.subr.mxu0 0.0
  %1468 = vmatpush1.msra.mxu0 0.0
  %1469 = vmatprep.subr.mxu0 0.0
  %1470 = vmatpush1.msra.mxu0 0.0
  %1471 = vmatprep.subr.mxu0 0.0
  %1472 = vmatpush1.msra.mxu0 0.0
  %1473 = vmatprep.subr.mxu0 0.0
  %1474 = vmatpush1.msra.mxu0 0.0
  %1475 = vmatprep.subr.mxu0 0.0
  %1476 = vmatpush1.msra.mxu0 0.0
  %1477 = vmatprep.subr.mxu0 0.0
  %1478 = vmatpush1.msra.mxu0 0.0
  %1479 = vmatprep.subr.mxu0 0.0
  %1480 = vmatpush1.msra.mxu0 0.0
  %1481 = vmatprep.subr.mxu0 0.0
  %1482 = vmatpush1.msra.mxu0 0.0
  %1483 = vmatprep.subr.mxu0 0.0
  %1484 = vmatpush1.msra.mxu0 0.0
  %1485 = vmatprep.subr.mxu0 0.0
  %1486 = vmatpush1.msra.mxu0 0.0
  %1487 = vmatprep.subr.mxu0 0.0
  %1488 = vmatpush1.msra.mxu0 0.0
  %1489 = vmatprep.subr.mxu0 0.0
  %1490 = vmatpush1.msra.mxu0 0.0
  %1491 = vmatprep.subr.mxu0 0.0
  %1492 = vmatpush1.msra.mxu0 0.0
  %1493 = vmatprep.subr.mxu0 0.0
  %1494 = vmatpush1.msra.mxu0 0.0
  %1495 = vmatprep.subr.mxu0 0.0
  %1496 = vmatpush1.msra.mxu0 0.0
  %1497 = vmatprep.subr.mxu0 0.0
  %1498 = vmatpush1.msra.mxu0 0.0
  %1499 = vmatprep.subr.mxu0 0.0
  %1500 = vmatpush1.msra.mxu0 0.0
  %1501 = vmatprep.subr.mxu0 0.0
  %1502 = vmatpush1.msra.mxu0 0.0
  %1503 = vmatprep.subr.mxu0 0.0
  %1504 = vmatpush1.msra.mxu0 0.0
  %1505 = vmatprep.subr.mxu0 0.0
  %1506 = vmatpush1.msra.mxu0 0.0
  %1507 = vmatprep.subr.mxu0 0.0
  %1508 = vmatpush1.msra.mxu0 0.0
  %1509 = vmatprep.mubr.f32.mxu0 0.0
  %1510 = vmatmul.mubr.f32.gmra.mrb[0].mxu0 %v1443
  %v1511 = vpop.f32.mrb[0].mxu0
  %v1512 = vadd.f32 %v1440, %v1511
  %v1513 = vpop.f32.mrb[0].mxu0
  %1514 = vdwg.mxu0
  %v1515 = vmax.f32 %v1512, 0.0
  %v1516 = vld [vmem:[%s8] sm:$0xff]
  %v1517 = vld [vmem:[%s8 + $0x8] sm:$0xff]
  %v1518 = vld [vmem:[%s8 + $0x10] sm:$0xff]
  %v1519 = vld [vmem:[%s8 + $0x18] sm:$0xff]
  %v1520 = vld [vmem:[%s9] sm:$0x1]
  %v1522 = vlaneseq
  %v1523 = vshrl.u32 %v1522, 7
  %v1524 = vsub.s32 0, %v1523
  %v1525 = vrot.slane %v1520, %v1524
  %v1528 = vsel %vm76, %v1515, 0
  %1530 = vmatprep.subr.mxu0 0.0
  %1531 = vmatpush1.msra.mxu0 %v1516
  %1532 = vmatprep.subr.mxu0 0.0
  %1533 = vmatpush1.msra.mxu0 %v1517
  %1534 = vmatprep.subr.mxu0 0.0
  %1535 = vmatpush1.msra.mxu0 %v1518
  %1536 = vmatprep.subr.mxu0 0.0
  %1537 = vmatpush1.msra.mxu0 %v1519
  %1538 = vmatprep.subr.mxu0 0.0
  %1539 = vmatpush1.msra.mxu0 0.0
  %1540 = vmatprep.subr.mxu0 0.0
  %1541 = vmatpush1.msra.mxu0 0.0
  %1542 = vmatprep.subr.mxu0 0.0
  %1543 = vmatpush1.msra.mxu0 0.0
  %1544 = vmatprep.subr.mxu0 0.0
  %1545 = vmatpush1.msra.mxu0 0.0
  %1546 = vmatprep.subr.mxu0 0.0
  %1547 = vmatpush1.msra.mxu0 0.0
  %1548 = vmatprep.subr.mxu0 0.0
  %1549 = vmatpush1.msra.mxu0 0.0
  %1550 = vmatprep.subr.mxu0 0.0
  %1551 = vmatpush1.msra.mxu0 0.0
  %1552 = vmatprep.subr.mxu0 0.0
  %1553 = vmatpush1.msra.mxu0 0.0
  %1554 = vmatprep.subr.mxu0 0.0
  %1555 = vmatpush1.msra.mxu0 0.0
  %1556 = vmatprep.subr.mxu0 0.0
  %1557 = vmatpush1.msra.mxu0 0.0
  %1558 = vmatprep.subr.mxu0 0.0
  %1559 = vmatpush1.msra.mxu0 0.0
  %1560 = vmatprep.subr.mxu0 0.0
  %1561 = vmatpush1.msra.mxu0 0.0
  %1562 = vmatprep.subr.mxu0 0.0
  %1563 = vmatpush1.msra.mxu0 0.0
  %1564 = vmatprep.subr.mxu0 0.0
  %1565 = vmatpush1.msra.mxu0 0.0
  %1566 = vmatprep.subr.mxu0 0.0
  %1567 = vmatpush1.msra.mxu0 0.0
  %1568 = vmatprep.subr.mxu0 0.0
  %1569 = vmatpush1.msra.mxu0 0.0
  %1570 = vmatprep.subr.mxu0 0.0
  %1571 = vmatpush1.msra.mxu0 0.0
  %1572 = vmatprep.subr.mxu0 0.0
  %1573 = vmatpush1.msra.mxu0 0.0
  %1574 = vmatprep.subr.mxu0 0.0
  %1575 = vmatpush1.msra.mxu0 0.0
  %1576 = vmatprep.subr.mxu0 0.0
  %1577 = vmatpush1.msra.mxu0 0.0
  %1578 = vmatprep.subr.mxu0 0.0
  %1579 = vmatpush1.msra.mxu0 0.0
  %1580 = vmatprep.subr.mxu0 0.0
  %1581 = vmatpush1.msra.mxu0 0.0
  %1582 = vmatprep.subr.mxu0 0.0
  %1583 = vmatpush1.msra.mxu0 0.0
  %1584 = vmatprep.subr.mxu0 0.0
  %1585 = vmatpush1.msra.mxu0 0.0
  %1586 = vmatprep.subr.mxu0 0.0
  %1587 = vmatpush1.msra.mxu0 0.0
  %1588 = vmatprep.subr.mxu0 0.0
  %1589 = vmatpush1.msra.mxu0 0.0
  %1590 = vmatprep.subr.mxu0 0.0
  %1591 = vmatpush1.msra.mxu0 0.0
  %1592 = vmatprep.subr.mxu0 0.0
  %1593 = vmatpush1.msra.mxu0 0.0
  %1594 = vmatprep.mubr.f32.mxu0 0.0
  %1595 = vmatmul.mubr.f32.gmra.mrb[0].mxu0 %v1528
  %v1596 = vpop.f32.mrb[0].mxu0
  %v1597 = vadd.f32 %v1525, %v1596
  %v1598 = vpop.f32.mrb[0].mxu0
  %1599 = vdwg.mxu0
  %v1600 = vmax.f32 %v1597, 0.0
  %v1601 = vld [vmem:[%s10] sm:$0xff]
  %v1602 = vld [vmem:[%s10 + $0x8] sm:$0xff]
  %v1603 = vld [vmem:[%s11] sm:$0x1]
  %v1605 = vlaneseq
  %v1606 = vshrl.u32 %v1605, 7
  %v1607 = vsub.s32 0, %v1606
  %v1608 = vrot.slane %v1603, %v1607
  %vm1610 = vcmask 130048
  %v1612 = vsel %vm1610, %v1600, 0
  %1614 = vmatprep.subr.mxu0 0.0
  %1615 = vmatpush1.msra.mxu0 %v1601
  %1616 = vmatprep.subr.mxu0 0.0
  %1617 = vmatpush1.msra.mxu0 %v1602
  %1618 = vmatprep.subr.mxu0 0.0
  %1619 = vmatpush1.msra.mxu0 0.0
  %1620 = vmatprep.subr.mxu0 0.0
  %1621 = vmatpush1.msra.mxu0 0.0
  %1622 = vmatprep.subr.mxu0 0.0
  %1623 = vmatpush1.msra.mxu0 0.0
  %1624 = vmatprep.subr.mxu0 0.0
  %1625 = vmatpush1.msra.mxu0 0.0
  %1626 = vmatprep.subr.mxu0 0.0
  %1627 = vmatpush1.msra.mxu0 0.0
  %1628 = vmatprep.subr.mxu0 0.0
  %1629 = vmatpush1.msra.mxu0 0.0
  %1630 = vmatprep.subr.mxu0 0.0
  %1631 = vmatpush1.msra.mxu0 0.0
  %1632 = vmatprep.subr.mxu0 0.0
  %1633 = vmatpush1.msra.mxu0 0.0
  %1634 = vmatprep.subr.mxu0 0.0
  %1635 = vmatpush1.msra.mxu0 0.0
  %1636 = vmatprep.subr.mxu0 0.0
  %1637 = vmatpush1.msra.mxu0 0.0
  %1638 = vmatprep.subr.mxu0 0.0
  %1639 = vmatpush1.msra.mxu0 0.0
  %1640 = vmatprep.subr.mxu0 0.0
  %1641 = vmatpush1.msra.mxu0 0.0
  %1642 = vmatprep.subr.mxu0 0.0
  %1643 = vmatpush1.msra.mxu0 0.0
  %1644 = vmatprep.subr.mxu0 0.0
  %1645 = vmatpush1.msra.mxu0 0.0
  %1646 = vmatprep.subr.mxu0 0.0
  %1647 = vmatpush1.msra.mxu0 0.0
  %1648 = vmatprep.subr.mxu0 0.0
  %1649 = vmatpush1.msra.mxu0 0.0
  %1650 = vmatprep.subr.mxu0 0.0
  %1651 = vmatpush1.msra.mxu0 0.0
  %1652 = vmatprep.subr.mxu0 0.0
  %1653 = vmatpush1.msra.mxu0 0.0
  %1654 = vmatprep.subr.mxu0 0.0
  %1655 = vmatpush1.msra.mxu0 0.0
  %1656 = vmatprep.subr.mxu0 0.0
  %1657 = vmatpush1.msra.mxu0 0.0
  %1658 = vmatprep.subr.mxu0 0.0
  %1659 = vmatpush1.msra.mxu0 0.0
  %1660 = vmatprep.subr.mxu0 0.0
  %1661 = vmatpush1.msra.mxu0 0.0
  %1662 = vmatprep.subr.mxu0 0.0
  %1663 = vmatpush1.msra.mxu0 0.0
  %1664 = vmatprep.subr.mxu0 0.0
  %1665 = vmatpush1.msra.mxu0 0.0
  %1666 = vmatprep.subr.mxu0 0.0
  %1667 = vmatpush1.msra.mxu0 0.0
  %1668 = vmatprep.subr.mxu0 0.0
  %1669 = vmatpush1.msra.mxu0 0.0
  %1670 = vmatprep.subr.mxu0 0.0
  %1671 = vmatpush1.msra.mxu0 0.0
  %1672 = vmatprep.subr.mxu0 0.0
  %1673 = vmatpush1.msra.mxu0 0.0
  %1674 = vmatprep.subr.mxu0 0.0
  %1675 = vmatpush1.msra.mxu0 0.0
  %1676 = vmatprep.subr.mxu0 0.0
  %1677 = vmatpush1.msra.mxu0 0.0
  %1678 = vmatprep.mubr.f32.mxu0 0.0
  %1679 = vmatmul.mubr.f32.gmra.mrb[0].mxu0 %v1612
  %v1680 = vpop.f32.mrb[0].mxu0
  %v1681 = vadd.f32 %v1608, %v1680
  %v1682 = vpop.f32.mrb[0].mxu0
  %1683 = vdwg.mxu0
  %v1684 = vxor.u32 %v1681, 2147483648
  %v1685 = vmul.f32 %v1684, 1.442695
  %v1686 = vpow.pop %v1685
  %v1687 = vadd.f32 %v1686, 1.0
  %v1688 = vrcp.pop %v1687
  %v1689 = vmul.f32 1.0, %v1688
  %1690 = vst [vmem:[%s12] sm:$0xff] %v1689
  // Predicated region
  $region50: #{sequence_classification_forward.1} parent=0 // pred_check
    _
  $region51: #{sequence_classification_forward.1} parent=0 // pred_check_branch
    %1692 = sbr.rel (0) target = $region53
  $region52: #{sequence_classification_forward.1} parent=0 // pred_region
    _
  $region53: #{sequence_classification_forward.1} parent=0 // pred_fallthru
    _
  // Predicated region
  $region54: #{sequence_classification_forward.1} parent=0 // pred_check
    _
  $region55: #{sequence_classification_forward.1} parent=0 // pred_check_branch
    %1694 = sbr.rel (0) target = $region57
  $region56: #{sequence_classification_forward.1} parent=0 // pred_region
    _
  $region57: #{sequence_classification_forward.1} parent=0 // pred_fallthru
    _

</llo_original>
